<compile_context>
chip_gen: v5e
topology: v5e:2x2
jax: 0.10.0
libtpu: 0.0.40
codegen_flags: <defaults>
</compile_context>

<pallas_src>
import functools

import jax
import jax.numpy as jnp
from jax.experimental import pallas as pl
from jax.experimental.pallas import tpu as pltpu


# ---------------------------------------------------------------------------
# Fused attention sub-block kernel
#   out = LayerNorm( x_q + MHA(x_q, x_kv, x_kv) )
# Grid is over the batch dimension; each step sees 2-D (L, D) slabs.
# ---------------------------------------------------------------------------

def _attn_block_kernel(xq_ref, xkv_ref,
                       wq_ref, bq_ref, wkv_ref, bkv_ref,
                       wo_ref, bo_ref, g_ref, beta_ref,
                       o_ref, *, n_head, scale, eps):
    xq = xq_ref[...].astype(jnp.float32)            # (Lq, D)  -- also the residual
    xkv = xkv_ref[...].astype(jnp.float32)          # (Lk, D)

    # Q projection and fused K/V projection (single (D, 2D) matmul).
    q = jnp.dot(xq, wq_ref[...], preferred_element_type=jnp.float32) + bq_ref[...]
    kv = jnp.dot(xkv, wkv_ref[...], preferred_element_type=jnp.float32) + bkv_ref[...]
    D = q.shape[-1]
    k = kv[:, :D]
    v = kv[:, D:]
    hd = D // n_head

    # Per-head attention on static lane slices; output stays lane-dense (Lq, D).
    ctx_parts = []
    for h in range(n_head):
        sl = slice(h * hd, (h + 1) * hd)
        qh, kh, vh = q[:, sl], k[:, sl], v[:, sl]
        # Contract on the last dims -> no explicit transpose of K.
        s = jax.lax.dot_general(
            qh, kh, (((1,), (1,)), ((), ())),
            preferred_element_type=jnp.float32) * scale          # (Lq, Lk)
        m = jnp.max(s, axis=-1, keepdims=True)
        p = jnp.exp(s - m)
        denom = jnp.sum(p, axis=-1, keepdims=True)
        p = p * pl.reciprocal(denom, approx=True)
        ctx_parts.append(jnp.dot(p, vh, preferred_element_type=jnp.float32))
    ctx = jnp.concatenate(ctx_parts, axis=-1)                     # (Lq, D)

    # Output projection + residual + LayerNorm, fused.
    out = jnp.dot(ctx, wo_ref[...], preferred_element_type=jnp.float32) + bo_ref[...]
    z = out + xq
    mu = jnp.mean(z, axis=-1, keepdims=True)
    var = jnp.mean((z - mu) ** 2, axis=-1, keepdims=True)
    zn = (z - mu) * jax.lax.rsqrt(var + eps)
    o_ref[...] = (zn * g_ref[...] + beta_ref[...]).astype(o_ref.dtype)


def attention_block(x_q, x_kv, p, n_head, eps=1e-5):
    """x_q: (B, Lq, D), x_kv: (B, Lk, D) -> LayerNorm(x_q + MHA(x_q, x_kv, x_kv))."""
    B, Lq, D = x_q.shape
    Lk = x_kv.shape[1]
    hd = D // n_head
    scale = 1.0 / (hd ** 0.5)

    kernel = functools.partial(_attn_block_kernel, n_head=n_head, scale=scale, eps=eps)
    return pl.pallas_call(
        kernel,
        out_shape=jax.ShapeDtypeStruct((B, Lq, D), x_q.dtype),
        grid=(B,),
        in_specs=[
            pl.BlockSpec((None, Lq, D), lambda b: (b, 0, 0)),   # x_q (squeezed batch)
            pl.BlockSpec((None, Lk, D), lambda b: (b, 0, 0)),   # x_kv
            pl.BlockSpec((D, D), lambda b: (0, 0)),             # wq
            pl.BlockSpec((1, D), lambda b: (0, 0)),             # bq
            pl.BlockSpec((D, 2 * D), lambda b: (0, 0)),         # wkv (fused K|V)
            pl.BlockSpec((1, 2 * D), lambda b: (0, 0)),         # bkv
            pl.BlockSpec((D, D), lambda b: (0, 0)),             # wo
            pl.BlockSpec((1, D), lambda b: (0, 0)),             # bo
            pl.BlockSpec((1, D), lambda b: (0, 0)),             # ln gamma
            pl.BlockSpec((1, D), lambda b: (0, 0)),             # ln beta
        ],
        out_specs=pl.BlockSpec((None, Lq, D), lambda b: (b, 0, 0)),
        compiler_params=pltpu.CompilerParams(
            dimension_semantics=("parallel",)),
    )(x_q, x_kv,
      p["wq"], p["bq"].reshape(1, D),
      p["wkv"], p["bkv"].reshape(1, 2 * D),
      p["wo"], p["bo"].reshape(1, D),
      p["ln_g"].reshape(1, D), p["ln_b"].reshape(1, D))


# ---------------------------------------------------------------------------
# Fused feed-forward sub-block kernel
#   out = LayerNorm( x + W2 @ relu(W1 @ x + b1) + b2 )
# Grid is row-tiled over the flattened (B*L, D) activation.
# ---------------------------------------------------------------------------

def _ff_block_kernel(x_ref, w1_ref, b1_ref, w2_ref, b2_ref, g_ref, beta_ref,
                     o_ref, *, eps):
    x = x_ref[...].astype(jnp.float32)                                   # (tm, D)
    h = jnp.dot(x, w1_ref[...], preferred_element_type=jnp.float32) + b1_ref[...]
    h = jnp.maximum(h, 0.0)
    y = jnp.dot(h, w2_ref[...], preferred_element_type=jnp.float32) + b2_ref[...]
    z = y + x
    mu = jnp.mean(z, axis=-1, keepdims=True)
    var = jnp.mean((z - mu) ** 2, axis=-1, keepdims=True)
    zn = (z - mu) * jax.lax.rsqrt(var + eps)
    o_ref[...] = (zn * g_ref[...] + beta_ref[...]).astype(o_ref.dtype)


def _row_tile(M, cap=256):
    """Largest multiple-of-8 divisor of M, capped (falls back to full M)."""
    if M % 8 != 0:
        return M
    tm = min(M, cap)
    while M % tm != 0:
        tm -= 8
    return tm


def ff_block(x2d, p, eps=1e-5):
    """x2d: (M, D) -> LayerNorm(x2d + FF(x2d))."""
    M, D = x2d.shape
    H = p["w1"].shape[1]
    tm = _row_tile(M)

    kernel = functools.partial(_ff_block_kernel, eps=eps)
    return pl.pallas_call(
        kernel,
        out_shape=jax.ShapeDtypeStruct((M, D), x2d.dtype),
        grid=(M // tm,),
        in_specs=[
            pl.BlockSpec((tm, D), lambda i: (i, 0)),
            pl.BlockSpec((D, H), lambda i: (0, 0)),
            pl.BlockSpec((1, H), lambda i: (0, 0)),
            pl.BlockSpec((H, D), lambda i: (0, 0)),
            pl.BlockSpec((1, D), lambda i: (0, 0)),
            pl.BlockSpec((1, D), lambda i: (0, 0)),
            pl.BlockSpec((1, D), lambda i: (0, 0)),
        ],
        out_specs=pl.BlockSpec((tm, D), lambda i: (i, 0)),
        compiler_params=pltpu.CompilerParams(
            dimension_semantics=("parallel",)),
    )(x2d, p["w1"], p["b1"].reshape(1, H), p["w2"], p["b2"].reshape(1, D),
      p["ln_g"].reshape(1, D), p["ln_b"].reshape(1, D))


# ---------------------------------------------------------------------------
# Model glue
# ---------------------------------------------------------------------------

def decoder_layer(dec_input, enc_output, p, n_head):
    B, L, D = dec_input.shape
    # self-attention sub-block (no causal mask is applied in the reference forward)
    norm1 = attention_block(dec_input, dec_input, p["attn1"], n_head)
    # cross-attention sub-block
    norm2 = attention_block(norm1, enc_output, p["attn2"], n_head)
    # feed-forward sub-block
    norm3 = ff_block(norm2.reshape(B * L, D), p["ff"])
    return norm3.reshape(B, L, D)
    # dropout layers are identity in eval mode.


def decoder_forward(dec_input1, enc_output1, layer_params, n_head):
    # Reference quirk: Decoder.forward feeds the ORIGINAL dec_input1 to every
    # layer, so only the LAST layer's output is observable.  Computing only the
    # last layer yields a bit-identical result (earlier layers are dead work).
    if not layer_params:
        return dec_input1
    return decoder_layer(dec_input1, enc_output1, layer_params[-1], n_head)


# ---------------------------------------------------------------------------
# Deterministic parameter initialization (K/V weights pre-fused into (D, 2D))
# ---------------------------------------------------------------------------

def init_attn_params(key, d_model):
    ks = jax.random.split(key, 4)
    scale = 1.0 / (d_model ** 0.5)

    def w(k, din, dout):
        return jax.random.normal(k, (din, dout), jnp.float32) * scale

    wq = w(ks[0], d_model, d_model)
    wk = w(ks[1], d_model, d_model)
    wv = w(ks[2], d_model, d_model)
    wo = w(ks[3], d_model, d_model)
    return dict(
        wq=wq, bq=jnp.zeros((d_model,), jnp.float32),
        wkv=jnp.concatenate([wk, wv], axis=1),
        bkv=jnp.zeros((2 * d_model,), jnp.float32),
        wo=wo, bo=jnp.zeros((d_model,), jnp.float32),
        ln_g=jnp.ones((d_model,), jnp.float32),
        ln_b=jnp.zeros((d_model,), jnp.float32),
    )


def init_layer_params(key, d_model, dff):
    ks = jax.random.split(key, 4)
    hidden = dff * d_model
    ff = dict(
        w1=jax.random.normal(ks[2], (d_model, hidden), jnp.float32) / (d_model ** 0.5),
        b1=jnp.zeros((hidden,), jnp.float32),
        w2=jax.random.normal(ks[3], (hidden, d_model), jnp.float32) / (hidden ** 0.5),
        b2=jnp.zeros((d_model,), jnp.float32),
        ln_g=jnp.ones((d_model,), jnp.float32),
        ln_b=jnp.zeros((d_model,), jnp.float32),
    )
    return dict(
        attn1=init_attn_params(ks[0], d_model),
        attn2=init_attn_params(ks[1], d_model),
        ff=ff,
    )


# ---------------------------------------------------------------------------

if __name__ == "__main__":
    n_layers = 2
    d_model = 32
    n_head = 4
    dff = 4
    B, L_dec, L_enc = 2, 8, 8

    key = jax.random.PRNGKey(0)
    k_in, k_enc, k_par = jax.random.split(key, 3)

    dec_input1 = jax.random.normal(k_in, (B, L_dec, d_model), jnp.float32)
    enc_output1 = jax.random.normal(k_enc, (B, L_enc, d_model), jnp.float32)

    layer_keys = jax.random.split(k_par, n_layers)
    layer_params = [init_layer_params(k, d_model, dff) for k in layer_keys]

    fwd = jax.jit(functools.partial(decoder_forward, n_head=n_head))
    out = fwd(dec_input1, enc_output1, layer_params)
    out = jax.block_until_ready(out)
    assert out.shape == (B, L_dec, d_model), out.shape
    print("KERNEL_OK")
</pallas_src>

<mosaic_0001>
module attributes {stable_mosaic.version = 11 : i64} {
  func.func @_ff_block_kernel(%arg0: i32, %arg1: memref<16x32xf32, #tpu.memory_space<vmem>>, %arg2: memref<32x128xf32, #tpu.memory_space<vmem>>, %arg3: memref<1x128xf32, #tpu.memory_space<vmem>>, %arg4: memref<128x32xf32, #tpu.memory_space<vmem>>, %arg5: memref<1x32xf32, #tpu.memory_space<vmem>>, %arg6: memref<1x32xf32, #tpu.memory_space<vmem>>, %arg7: memref<1x32xf32, #tpu.memory_space<vmem>>, %arg8: memref<16x32xf32, #tpu.memory_space<vmem>>) attributes {dimension_semantics = [#tpu.dimension_semantics<parallel>], iteration_bounds = array<i64: 1>, scalar_prefetch = 0 : i64, scratch_operands = 0 : i64, tpu.core_type = #tpu.core_type<tc>, window_params = [{transform_indices = @transform_0, window_bounds = array<i64: 16, 32>}, {pipeline_mode = #tpu.pipeline_mode<synchronous>, transform_indices = @transform_1, window_bounds = array<i64: 32, 128>}, {pipeline_mode = #tpu.pipeline_mode<synchronous>, transform_indices = @transform_2, window_bounds = array<i64: 1, 128>}, {pipeline_mode = #tpu.pipeline_mode<synchronous>, transform_indices = @transform_3, window_bounds = array<i64: 128, 32>}, {pipeline_mode = #tpu.pipeline_mode<synchronous>, transform_indices = @transform_4, window_bounds = array<i64: 1, 32>}, {pipeline_mode = #tpu.pipeline_mode<synchronous>, transform_indices = @transform_5, window_bounds = array<i64: 1, 32>}, {pipeline_mode = #tpu.pipeline_mode<synchronous>, transform_indices = @transform_6, window_bounds = array<i64: 1, 32>}, {transform_indices = @transform_7, window_bounds = array<i64: 16, 32>}]} {
    %c0 = arith.constant 0 : index
    %c0_0 = arith.constant 0 : index
    %0 = vector.load %arg1[%c0, %c0_0] : memref<16x32xf32, #tpu.memory_space<vmem>>, vector<16x32xf32>
    %c0_1 = arith.constant 0 : index
    %c0_2 = arith.constant 0 : index
    %1 = vector.load %arg2[%c0_1, %c0_2] : memref<32x128xf32, #tpu.memory_space<vmem>>, vector<32x128xf32>
    %cst = arith.constant dense<0.000000e+00> : vector<16x128xf32>
    %2 = tpu.matmul %0, %1, %cst {dimension_numbers = #tpu.dot_dimension_numbers<[1], [0], [0], [1], [0, 0, 1, 1], [], []>} : vector<16x32xf32>, vector<32x128xf32>, vector<16x128xf32> -> vector<16x128xf32>
    %c0_3 = arith.constant 0 : index
    %c0_4 = arith.constant 0 : index
    %3 = vector.load %arg3[%c0_3, %c0_4] : memref<1x128xf32, #tpu.memory_space<vmem>>, vector<1x128xf32>
    %4 = vector.broadcast %3 : vector<1x128xf32> to vector<16x128xf32>
    %5 = arith.addf %2, %4 : vector<16x128xf32>
    %cst_5 = arith.constant 0.000000e+00 : f32
    %6 = vector.broadcast %cst_5 : f32 to vector<16x128xf32>
    %7 = arith.maximumf %5, %6 : vector<16x128xf32>
    %c0_6 = arith.constant 0 : index
    %c0_7 = arith.constant 0 : index
    %8 = vector.load %arg4[%c0_6, %c0_7] : memref<128x32xf32, #tpu.memory_space<vmem>>, vector<128x32xf32>
    %cst_8 = arith.constant dense<0.000000e+00> : vector<16x32xf32>
    %9 = tpu.matmul %7, %8, %cst_8 {dimension_numbers = #tpu.dot_dimension_numbers<[1], [0], [0], [1], [0, 0, 1, 1], [], []>} : vector<16x128xf32>, vector<128x32xf32>, vector<16x32xf32> -> vector<16x32xf32>
    %c0_9 = arith.constant 0 : index
    %c0_10 = arith.constant 0 : index
    %10 = vector.load %arg5[%c0_9, %c0_10] : memref<1x32xf32, #tpu.memory_space<vmem>>, vector<1x32xf32>
    %11 = vector.broadcast %10 : vector<1x32xf32> to vector<16x32xf32>
    %12 = arith.addf %9, %11 : vector<16x32xf32>
    %13 = arith.addf %12, %0 : vector<16x32xf32>
    %cst_11 = arith.constant dense<0.000000e+00> : vector<16xf32>
    %14 = vector.multi_reduction <add>, %13, %cst_11 [1] : vector<16x32xf32> to vector<16xf32>
    %15 = vector.shape_cast %14 : vector<16xf32> to vector<16x1xf32>
    %cst_12 = arith.constant 3.200000e+01 : f32
    %16 = vector.broadcast %cst_12 : f32 to vector<16x1xf32>
    %17 = arith.divf %15, %16 : vector<16x1xf32>
    %18 = vector.broadcast %17 : vector<16x1xf32> to vector<16x32xf32>
    %19 = arith.subf %13, %18 : vector<16x32xf32>
    %20 = arith.mulf %19, %19 : vector<16x32xf32>
    %cst_13 = arith.constant dense<0.000000e+00> : vector<16xf32>
    %21 = vector.multi_reduction <add>, %20, %cst_13 [1] : vector<16x32xf32> to vector<16xf32>
    %22 = vector.shape_cast %21 : vector<16xf32> to vector<16x1xf32>
    %cst_14 = arith.constant 3.200000e+01 : f32
    %23 = vector.broadcast %cst_14 : f32 to vector<16x1xf32>
    %24 = arith.divf %22, %23 : vector<16x1xf32>
    %25 = vector.broadcast %17 : vector<16x1xf32> to vector<16x32xf32>
    %26 = arith.subf %13, %25 : vector<16x32xf32>
    %cst_15 = arith.constant 9.99999974E-6 : f32
    %27 = vector.broadcast %cst_15 : f32 to vector<16x1xf32>
    %28 = arith.addf %24, %27 : vector<16x1xf32>
    %29 = math.rsqrt %28 : vector<16x1xf32>
    %30 = vector.broadcast %29 : vector<16x1xf32> to vector<16x32xf32>
    %31 = arith.mulf %26, %30 : vector<16x32xf32>
    %c0_16 = arith.constant 0 : index
    %c0_17 = arith.constant 0 : index
    %32 = vector.load %arg6[%c0_16, %c0_17] : memref<1x32xf32, #tpu.memory_space<vmem>>, vector<1x32xf32>
    %33 = vector.broadcast %32 : vector<1x32xf32> to vector<16x32xf32>
    %34 = arith.mulf %31, %33 : vector<16x32xf32>
    %c0_18 = arith.constant 0 : index
    %c0_19 = arith.constant 0 : index
    %35 = vector.load %arg7[%c0_18, %c0_19] : memref<1x32xf32, #tpu.memory_space<vmem>>, vector<1x32xf32>
    %36 = vector.broadcast %35 : vector<1x32xf32> to vector<16x32xf32>
    %37 = arith.addf %34, %36 : vector<16x32xf32>
    %c0_20 = arith.constant 0 : index
    %c0_21 = arith.constant 0 : index
    %38 = vector.load %arg8[%c0_20, %c0_21] : memref<16x32xf32, #tpu.memory_space<vmem>>, vector<16x32xf32>
    tpu.vector_store %arg8[%c0_20, %c0_21], %37 {strides = array<i32>} : memref<16x32xf32, #tpu.memory_space<vmem>>, vector<16x32xf32>,
    return
  }
  func.func @transform_0(%arg0: i32) -> (i32, i32) {
    %c0_i32 = arith.constant 0 : i32
    %c0_i32_0 = arith.constant 0 : i32
    return %arg0, %c0_i32 : i32, i32
  }
  func.func @transform_1(%arg0: i32) -> (i32, i32) {
    %c0_i32 = arith.constant 0 : i32
    %c0_i32_0 = arith.constant 0 : i32
    %c0_i32_1 = arith.constant 0 : i32
    return %c0_i32, %c0_i32_0 : i32, i32
  }
  func.func @transform_2(%arg0: i32) -> (i32, i32) {
    %c0_i32 = arith.constant 0 : i32
    %c0_i32_0 = arith.constant 0 : i32
    %c0_i32_1 = arith.constant 0 : i32
    return %c0_i32, %c0_i32_0 : i32, i32
  }
  func.func @transform_3(%arg0: i32) -> (i32, i32) {
    %c0_i32 = arith.constant 0 : i32
    %c0_i32_0 = arith.constant 0 : i32
    %c0_i32_1 = arith.constant 0 : i32
    return %c0_i32, %c0_i32_0 : i32, i32
  }
  func.func @transform_4(%arg0: i32) -> (i32, i32) {
    %c0_i32 = arith.constant 0 : i32
    %c0_i32_0 = arith.constant 0 : i32
    %c0_i32_1 = arith.constant 0 : i32
    return %c0_i32, %c0_i32_0 : i32, i32
  }
  func.func @transform_5(%arg0: i32) -> (i32, i32) {
    %c0_i32 = arith.constant 0 : i32
    %c0_i32_0 = arith.constant 0 : i32
    %c0_i32_1 = arith.constant 0 : i32
    return %c0_i32, %c0_i32_0 : i32, i32
  }
  func.func @transform_6(%arg0: i32) -> (i32, i32) {
    %c0_i32 = arith.constant 0 : i32
    %c0_i32_0 = arith.constant 0 : i32
    %c0_i32_1 = arith.constant 0 : i32
    return %c0_i32, %c0_i32_0 : i32, i32
  }
  func.func @transform_7(%arg0: i32) -> (i32, i32) {
    %c0_i32 = arith.constant 0 : i32
    %c0_i32_0 = arith.constant 0 : i32
    return %arg0, %c0_i32 : i32, i32
  }
}

module attributes {stable_mosaic.version = 11 : i64} {
  func.func @_attn_block_kernel(%arg0: i32, %arg1: memref<1x8x32xf32, #tpu.memory_space<vmem>>, %arg2: memref<1x8x32xf32, #tpu.memory_space<vmem>>, %arg3: memref<32x32xf32, #tpu.memory_space<vmem>>, %arg4: memref<1x32xf32, #tpu.memory_space<vmem>>, %arg5: memref<32x64xf32, #tpu.memory_space<vmem>>, %arg6: memref<1x64xf32, #tpu.memory_space<vmem>>, %arg7: memref<32x32xf32, #tpu.memory_space<vmem>>, %arg8: memref<1x32xf32, #tpu.memory_space<vmem>>, %arg9: memref<1x32xf32, #tpu.memory_space<vmem>>, %arg10: memref<1x32xf32, #tpu.memory_space<vmem>>, %arg11: memref<1x8x32xf32, #tpu.memory_space<vmem>>) attributes {dimension_semantics = [#tpu.dimension_semantics<parallel>], iteration_bounds = array<i64: 2>, scalar_prefetch = 0 : i64, scratch_operands = 0 : i64, tpu.core_type = #tpu.core_type<tc>, window_params = [{transform_indices = @transform_0, window_bounds = array<i64: 1, 8, 32>}, {transform_indices = @transform_1, window_bounds = array<i64: 1, 8, 32>}, {pipeline_mode = #tpu.pipeline_mode<synchronous>, transform_indices = @transform_2, window_bounds = array<i64: 32, 32>}, {pipeline_mode = #tpu.pipeline_mode<synchronous>, transform_indices = @transform_3, window_bounds = array<i64: 1, 32>}, {pipeline_mode = #tpu.pipeline_mode<synchronous>, transform_indices = @transform_4, window_bounds = array<i64: 32, 64>}, {pipeline_mode = #tpu.pipeline_mode<synchronous>, transform_indices = @transform_5, window_bounds = array<i64: 1, 64>}, {pipeline_mode = #tpu.pipeline_mode<synchronous>, transform_indices = @transform_6, window_bounds = array<i64: 32, 32>}, {pipeline_mode = #tpu.pipeline_mode<synchronous>, transform_indices = @transform_7, window_bounds = array<i64: 1, 32>}, {pipeline_mode = #tpu.pipeline_mode<synchronous>, transform_indices = @transform_8, window_bounds = array<i64: 1, 32>}, {pipeline_mode = #tpu.pipeline_mode<synchronous>, transform_indices = @transform_9, window_bounds = array<i64: 1, 32>}, {transform_indices = @transform_10, window_bounds = array<i64: 1, 8, 32>}]} {
    %c0 = arith.constant 0 : index
    %c0_0 = arith.constant 0 : index
    %c0_1 = arith.constant 0 : index
    %0 = vector.load %arg1[%c0, %c0_0, %c0_1] : memref<1x8x32xf32, #tpu.memory_space<vmem>>, vector<1x8x32xf32>
    %1 = vector.shape_cast %0 : vector<1x8x32xf32> to vector<8x32xf32>
    %c0_2 = arith.constant 0 : index
    %c0_3 = arith.constant 0 : index
    %c0_4 = arith.constant 0 : index
    %2 = vector.load %arg2[%c0_2, %c0_3, %c0_4] : memref<1x8x32xf32, #tpu.memory_space<vmem>>, vector<1x8x32xf32>
    %3 = vector.shape_cast %2 : vector<1x8x32xf32> to vector<8x32xf32>
    %c0_5 = arith.constant 0 : index
    %c0_6 = arith.constant 0 : index
    %4 = vector.load %arg3[%c0_5, %c0_6] : memref<32x32xf32, #tpu.memory_space<vmem>>, vector<32x32xf32>
    %cst = arith.constant dense<0.000000e+00> : vector<8x32xf32>
    %5 = tpu.matmul %1, %4, %cst {dimension_numbers = #tpu.dot_dimension_numbers<[1], [0], [0], [1], [0, 0, 1, 1], [], []>} : vector<8x32xf32>, vector<32x32xf32>, vector<8x32xf32> -> vector<8x32xf32>
    %c0_7 = arith.constant 0 : index
    %c0_8 = arith.constant 0 : index
    %6 = vector.load %arg4[%c0_7, %c0_8] : memref<1x32xf32, #tpu.memory_space<vmem>>, vector<1x32xf32>
    %7 = vector.broadcast %6 : vector<1x32xf32> to vector<8x32xf32>
    %8 = arith.addf %5, %7 : vector<8x32xf32>
    %c0_9 = arith.constant 0 : index
    %c0_10 = arith.constant 0 : index
    %9 = vector.load %arg5[%c0_9, %c0_10] : memref<32x64xf32, #tpu.memory_space<vmem>>, vector<32x64xf32>
    %cst_11 = arith.constant dense<0.000000e+00> : vector<8x64xf32>
    %10 = tpu.matmul %3, %9, %cst_11 {dimension_numbers = #tpu.dot_dimension_numbers<[1], [0], [0], [1], [0, 0, 1, 1], [], []>} : vector<8x32xf32>, vector<32x64xf32>, vector<8x64xf32> -> vector<8x64xf32>
    %c0_12 = arith.constant 0 : index
    %c0_13 = arith.constant 0 : index
    %11 = vector.load %arg6[%c0_12, %c0_13] : memref<1x64xf32, #tpu.memory_space<vmem>>, vector<1x64xf32>
    %12 = vector.broadcast %11 : vector<1x64xf32> to vector<8x64xf32>
    %13 = arith.addf %10, %12 : vector<8x64xf32>
    %14 = vector.extract_strided_slice %13 {offsets = [0, 0], sizes = [8, 32], strides = [1, 1]} : vector<8x64xf32> to vector<8x32xf32>
    %15 = vector.extract_strided_slice %13 {offsets = [0, 32], sizes = [8, 32], strides = [1, 1]} : vector<8x64xf32> to vector<8x32xf32>
    %16 = vector.extract_strided_slice %8 {offsets = [0, 0], sizes = [8, 8], strides = [1, 1]} : vector<8x32xf32> to vector<8x8xf32>
    %17 = vector.extract_strided_slice %14 {offsets = [0, 0], sizes = [8, 8], strides = [1, 1]} : vector<8x32xf32> to vector<8x8xf32>
    %18 = vector.extract_strided_slice %15 {offsets = [0, 0], sizes = [8, 8], strides = [1, 1]} : vector<8x32xf32> to vector<8x8xf32>
    %cst_14 = arith.constant dense<0.000000e+00> : vector<8x8xf32>
    %19 = tpu.matmul %16, %17, %cst_14 {dimension_numbers = #tpu.dot_dimension_numbers<[1], [1], [0], [0], [0, 0, 1, 0], [], []>} : vector<8x8xf32>, vector<8x8xf32>, vector<8x8xf32> -> vector<8x8xf32>
    %cst_15 = arith.constant 0.353553385 : f32
    %20 = vector.broadcast %cst_15 : f32 to vector<8x8xf32>
    %21 = arith.mulf %19, %20 : vector<8x8xf32>
    %cst_16 = arith.constant dense<0xFF800000> : vector<8xf32>
    %22 = vector.multi_reduction <maximumf>, %21, %cst_16 [1] : vector<8x8xf32> to vector<8xf32>
    %23 = vector.shape_cast %22 : vector<8xf32> to vector<8x1xf32>
    %24 = vector.broadcast %23 : vector<8x1xf32> to vector<8x8xf32>
    %25 = arith.subf %21, %24 : vector<8x8xf32>
    %26 = math.exp %25 : vector<8x8xf32>
    %cst_17 = arith.constant dense<0.000000e+00> : vector<8xf32>
    %27 = vector.multi_reduction <add>, %26, %cst_17 [1] : vector<8x8xf32> to vector<8xf32>
    %28 = vector.shape_cast %27 : vector<8xf32> to vector<8x1xf32>
    %29 = tpu.reciprocal %28 {approx = true} : vector<8x1xf32> -> vector<8x1xf32>
    %30 = vector.broadcast %29 : vector<8x1xf32> to vector<8x8xf32>
    %31 = arith.mulf %26, %30 : vector<8x8xf32>
    %cst_18 = arith.constant dense<0.000000e+00> : vector<8x8xf32>
    %32 = tpu.matmul %31, %18, %cst_18 {dimension_numbers = #tpu.dot_dimension_numbers<[1], [0], [0], [1], [0, 0, 1, 1], [], []>} : vector<8x8xf32>, vector<8x8xf32>, vector<8x8xf32> -> vector<8x8xf32>
    %33 = vector.extract_strided_slice %8 {offsets = [0, 8], sizes = [8, 8], strides = [1, 1]} : vector<8x32xf32> to vector<8x8xf32>
    %34 = vector.extract_strided_slice %14 {offsets = [0, 8], sizes = [8, 8], strides = [1, 1]} : vector<8x32xf32> to vector<8x8xf32>
    %35 = vector.extract_strided_slice %15 {offsets = [0, 8], sizes = [8, 8], strides = [1, 1]} : vector<8x32xf32> to vector<8x8xf32>
    %cst_19 = arith.constant dense<0.000000e+00> : vector<8x8xf32>
    %36 = tpu.matmul %33, %34, %cst_19 {dimension_numbers = #tpu.dot_dimension_numbers<[1], [1], [0], [0], [0, 0, 1, 0], [], []>} : vector<8x8xf32>, vector<8x8xf32>, vector<8x8xf32> -> vector<8x8xf32>
    %cst_20 = arith.constant 0.353553385 : f32
    %37 = vector.broadcast %cst_20 : f32 to vector<8x8xf32>
    %38 = arith.mulf %36, %37 : vector<8x8xf32>
    %cst_21 = arith.constant dense<0xFF800000> : vector<8xf32>
    %39 = vector.multi_reduction <maximumf>, %38, %cst_21 [1] : vector<8x8xf32> to vector<8xf32>
    %40 = vector.shape_cast %39 : vector<8xf32> to vector<8x1xf32>
    %41 = vector.broadcast %40 : vector<8x1xf32> to vector<8x8xf32>
    %42 = arith.subf %38, %41 : vector<8x8xf32>
    %43 = math.exp %42 : vector<8x8xf32>
    %cst_22 = arith.constant dense<0.000000e+00> : vector<8xf32>
    %44 = vector.multi_reduction <add>, %43, %cst_22 [1] : vector<8x8xf32> to vector<8xf32>
    %45 = vector.shape_cast %44 : vector<8xf32> to vector<8x1xf32>
    %46 = tpu.reciprocal %45 {approx = true} : vector<8x1xf32> -> vector<8x1xf32>
    %47 = vector.broadcast %46 : vector<8x1xf32> to vector<8x8xf32>
    %48 = arith.mulf %43, %47 : vector<8x8xf32>
    %cst_23 = arith.constant dense<0.000000e+00> : vector<8x8xf32>
    %49 = tpu.matmul %48, %35, %cst_23 {dimension_numbers = #tpu.dot_dimension_numbers<[1], [0], [0], [1], [0, 0, 1, 1], [], []>} : vector<8x8xf32>, vector<8x8xf32>, vector<8x8xf32> -> vector<8x8xf32>
    %50 = vector.extract_strided_slice %8 {offsets = [0, 16], sizes = [8, 8], strides = [1, 1]} : vector<8x32xf32> to vector<8x8xf32>
    %51 = vector.extract_strided_slice %14 {offsets = [0, 16], sizes = [8, 8], strides = [1, 1]} : vector<8x32xf32> to vector<8x8xf32>
    %52 = vector.extract_strided_slice %15 {offsets = [0, 16], sizes = [8, 8], strides = [1, 1]} : vector<8x32xf32> to vector<8x8xf32>
    %cst_24 = arith.constant dense<0.000000e+00> : vector<8x8xf32>
    %53 = tpu.matmul %50, %51, %cst_24 {dimension_numbers = #tpu.dot_dimension_numbers<[1], [1], [0], [0], [0, 0, 1, 0], [], []>} : vector<8x8xf32>, vector<8x8xf32>, vector<8x8xf32> -> vector<8x8xf32>
    %cst_25 = arith.constant 0.353553385 : f32
    %54 = vector.broadcast %cst_25 : f32 to vector<8x8xf32>
    %55 = arith.mulf %53, %54 : vector<8x8xf32>
    %cst_26 = arith.constant dense<0xFF800000> : vector<8xf32>
    %56 = vector.multi_reduction <maximumf>, %55, %cst_26 [1] : vector<8x8xf32> to vector<8xf32>
    %57 = vector.shape_cast %56 : vector<8xf32> to vector<8x1xf32>
    %58 = vector.broadcast %57 : vector<8x1xf32> to vector<8x8xf32>
    %59 = arith.subf %55, %58 : vector<8x8xf32>
    %60 = math.exp %59 : vector<8x8xf32>
    %cst_27 = arith.constant dense<0.000000e+00> : vector<8xf32>
    %61 = vector.multi_reduction <add>, %60, %cst_27 [1] : vector<8x8xf32> to vector<8xf32>
    %62 = vector.shape_cast %61 : vector<8xf32> to vector<8x1xf32>
    %63 = tpu.reciprocal %62 {approx = true} : vector<8x1xf32> -> vector<8x1xf32>
    %64 = vector.broadcast %63 : vector<8x1xf32> to vector<8x8xf32>
    %65 = arith.mulf %60, %64 : vector<8x8xf32>
    %cst_28 = arith.constant dense<0.000000e+00> : vector<8x8xf32>
    %66 = tpu.matmul %65, %52, %cst_28 {dimension_numbers = #tpu.dot_dimension_numbers<[1], [0], [0], [1], [0, 0, 1, 1], [], []>} : vector<8x8xf32>, vector<8x8xf32>, vector<8x8xf32> -> vector<8x8xf32>
    %67 = vector.extract_strided_slice %8 {offsets = [0, 24], sizes = [8, 8], strides = [1, 1]} : vector<8x32xf32> to vector<8x8xf32>
    %68 = vector.extract_strided_slice %14 {offsets = [0, 24], sizes = [8, 8], strides = [1, 1]} : vector<8x32xf32> to vector<8x8xf32>
    %69 = vector.extract_strided_slice %15 {offsets = [0, 24], sizes = [8, 8], strides = [1, 1]} : vector<8x32xf32> to vector<8x8xf32>
    %cst_29 = arith.constant dense<0.000000e+00> : vector<8x8xf32>
    %70 = tpu.matmul %67, %68, %cst_29 {dimension_numbers = #tpu.dot_dimension_numbers<[1], [1], [0], [0], [0, 0, 1, 0], [], []>} : vector<8x8xf32>, vector<8x8xf32>, vector<8x8xf32> -> vector<8x8xf32>
    %cst_30 = arith.constant 0.353553385 : f32
    %71 = vector.broadcast %cst_30 : f32 to vector<8x8xf32>
    %72 = arith.mulf %70, %71 : vector<8x8xf32>
    %cst_31 = arith.constant dense<0xFF800000> : vector<8xf32>
    %73 = vector.multi_reduction <maximumf>, %72, %cst_31 [1] : vector<8x8xf32> to vector<8xf32>
    %74 = vector.shape_cast %73 : vector<8xf32> to vector<8x1xf32>
    %75 = vector.broadcast %74 : vector<8x1xf32> to vector<8x8xf32>
    %76 = arith.subf %72, %75 : vector<8x8xf32>
    %77 = math.exp %76 : vector<8x8xf32>
    %cst_32 = arith.constant dense<0.000000e+00> : vector<8xf32>
    %78 = vector.multi_reduction <add>, %77, %cst_32 [1] : vector<8x8xf32> to vector<8xf32>
    %79 = vector.shape_cast %78 : vector<8xf32> to vector<8x1xf32>
    %80 = tpu.reciprocal %79 {approx = true} : vector<8x1xf32> -> vector<8x1xf32>
    %81 = vector.broadcast %80 : vector<8x1xf32> to vector<8x8xf32>
    %82 = arith.mulf %77, %81 : vector<8x8xf32>
    %cst_33 = arith.constant dense<0.000000e+00> : vector<8x8xf32>
    %83 = tpu.matmul %82, %69, %cst_33 {dimension_numbers = #tpu.dot_dimension_numbers<[1], [0], [0], [1], [0, 0, 1, 1], [], []>} : vector<8x8xf32>, vector<8x8xf32>, vector<8x8xf32> -> vector<8x8xf32>
    %84 = tpu.concatenate %32, %49, %66, %83 in 1 : vector<8x8xf32>, vector<8x8xf32>, vector<8x8xf32>, vector<8x8xf32> -> vector<8x32xf32>
    %c0_34 = arith.constant 0 : index
    %c0_35 = arith.constant 0 : index
    %85 = vector.load %arg7[%c0_34, %c0_35] : memref<32x32xf32, #tpu.memory_space<vmem>>, vector<32x32xf32>
    %cst_36 = arith.constant dense<0.000000e+00> : vector<8x32xf32>
    %86 = tpu.matmul %84, %85, %cst_36 {dimension_numbers = #tpu.dot_dimension_numbers<[1], [0], [0], [1], [0, 0, 1, 1], [], []>} : vector<8x32xf32>, vector<32x32xf32>, vector<8x32xf32> -> vector<8x32xf32>
    %c0_37 = arith.constant 0 : index
    %c0_38 = arith.constant 0 : index
    %87 = vector.load %arg8[%c0_37, %c0_38] : memref<1x32xf32, #tpu.memory_space<vmem>>, vector<1x32xf32>
    %88 = vector.broadcast %87 : vector<1x32xf32> to vector<8x32xf32>
    %89 = arith.addf %86, %88 : vector<8x32xf32>
    %90 = arith.addf %89, %1 : vector<8x32xf32>
    %cst_39 = arith.constant dense<0.000000e+00> : vector<8xf32>
    %91 = vector.multi_reduction <add>, %90, %cst_39 [1] : vector<8x32xf32> to vector<8xf32>
    %92 = vector.shape_cast %91 : vector<8xf32> to vector<8x1xf32>
    %cst_40 = arith.constant 3.200000e+01 : f32
    %93 = vector.broadcast %cst_40 : f32 to vector<8x1xf32>
    %94 = arith.divf %92, %93 : vector<8x1xf32>
    %95 = vector.broadcast %94 : vector<8x1xf32> to vector<8x32xf32>
    %96 = arith.subf %90, %95 : vector<8x32xf32>
    %97 = arith.mulf %96, %96 : vector<8x32xf32>
    %cst_41 = arith.constant dense<0.000000e+00> : vector<8xf32>
    %98 = vector.multi_reduction <add>, %97, %cst_41 [1] : vector<8x32xf32> to vector<8xf32>
    %99 = vector.shape_cast %98 : vector<8xf32> to vector<8x1xf32>
    %cst_42 = arith.constant 3.200000e+01 : f32
    %100 = vector.broadcast %cst_42 : f32 to vector<8x1xf32>
    %101 = arith.divf %99, %100 : vector<8x1xf32>
    %102 = vector.broadcast %94 : vector<8x1xf32> to vector<8x32xf32>
    %103 = arith.subf %90, %102 : vector<8x32xf32>
    %cst_43 = arith.constant 9.99999974E-6 : f32
    %104 = vector.broadcast %cst_43 : f32 to vector<8x1xf32>
    %105 = arith.addf %101, %104 : vector<8x1xf32>
    %106 = math.rsqrt %105 : vector<8x1xf32>
    %107 = vector.broadcast %106 : vector<8x1xf32> to vector<8x32xf32>
    %108 = arith.mulf %103, %107 : vector<8x32xf32>
    %c0_44 = arith.constant 0 : index
    %c0_45 = arith.constant 0 : index
    %109 = vector.load %arg9[%c0_44, %c0_45] : memref<1x32xf32, #tpu.memory_space<vmem>>, vector<1x32xf32>
    %110 = vector.broadcast %109 : vector<1x32xf32> to vector<8x32xf32>
    %111 = arith.mulf %108, %110 : vector<8x32xf32>
    %c0_46 = arith.constant 0 : index
    %c0_47 = arith.constant 0 : index
    %112 = vector.load %arg10[%c0_46, %c0_47] : memref<1x32xf32, #tpu.memory_space<vmem>>, vector<1x32xf32>
    %113 = vector.broadcast %112 : vector<1x32xf32> to vector<8x32xf32>
    %114 = arith.addf %111, %113 : vector<8x32xf32>
    %c0_48 = arith.constant 0 : index
    %c0_49 = arith.constant 0 : index
    %c0_50 = arith.constant 0 : index
    %115 = vector.load %arg11[%c0_48, %c0_49, %c0_50] : memref<1x8x32xf32, #tpu.memory_space<vmem>>, vector<1x8x32xf32>
    %116 = vector.shape_cast %115 : vector<1x8x32xf32> to vector<8x32xf32>
    %117 = vector.shape_cast %114 : vector<8x32xf32> to vector<1x8x32xf32>
    tpu.vector_store %arg11[%c0_48, %c0_49, %c0_50], %117 {strides = array<i32>} : memref<1x8x32xf32, #tpu.memory_space<vmem>>, vector<1x8x32xf32>,
    return
  }
  func.func @transform_0(%arg0: i32) -> (i32, i32, i32) {
    %c0_i32 = arith.constant 0 : i32
    %c0_i32_0 = arith.constant 0 : i32
    %c0_i32_1 = arith.constant 0 : i32
    return %arg0, %c0_i32, %c0_i32_0 : i32, i32, i32
  }
  func.func @transform_1(%arg0: i32) -> (i32, i32, i32) {
    %c0_i32 = arith.constant 0 : i32
    %c0_i32_0 = arith.constant 0 : i32
    %c0_i32_1 = arith.constant 0 : i32
    return %arg0, %c0_i32, %c0_i32_0 : i32, i32, i32
  }
  func.func @transform_2(%arg0: i32) -> (i32, i32) {
    %c0_i32 = arith.constant 0 : i32
    %c0_i32_0 = arith.constant 0 : i32
    %c0_i32_1 = arith.constant 0 : i32
    return %c0_i32, %c0_i32_0 : i32, i32
  }
  func.func @transform_3(%arg0: i32) -> (i32, i32) {
    %c0_i32 = arith.constant 0 : i32
    %c0_i32_0 = arith.constant 0 : i32
    %c0_i32_1 = arith.constant 0 : i32
    return %c0_i32, %c0_i32_0 : i32, i32
  }
  func.func @transform_4(%arg0: i32) -> (i32, i32) {
    %c0_i32 = arith.constant 0 : i32
    %c0_i32_0 = arith.constant 0 : i32
    %c0_i32_1 = arith.constant 0 : i32
    return %c0_i32, %c0_i32_0 : i32, i32
  }
  func.func @transform_5(%arg0: i32) -> (i32, i32) {
    %c0_i32 = arith.constant 0 : i32
    %c0_i32_0 = arith.constant 0 : i32
    %c0_i32_1 = arith.constant 0 : i32
    return %c0_i32, %c0_i32_0 : i32, i32
  }
  func.func @transform_6(%arg0: i32) -> (i32, i32) {
    %c0_i32 = arith.constant 0 : i32
    %c0_i32_0 = arith.constant 0 : i32
    %c0_i32_1 = arith.constant 0 : i32
    return %c0_i32, %c0_i32_0 : i32, i32
  }
  func.func @transform_7(%arg0: i32) -> (i32, i32) {
    %c0_i32 = arith.constant 0 : i32
    %c0_i32_0 = arith.constant 0 : i32
    %c0_i32_1 = arith.constant 0 : i32
    return %c0_i32, %c0_i32_0 : i32, i32
  }
  func.func @transform_8(%arg0: i32) -> (i32, i32) {
    %c0_i32 = arith.constant 0 : i32
    %c0_i32_0 = arith.constant 0 : i32
    %c0_i32_1 = arith.constant 0 : i32
    return %c0_i32, %c0_i32_0 : i32, i32
  }
  func.func @transform_9(%arg0: i32) -> (i32, i32) {
    %c0_i32 = arith.constant 0 : i32
    %c0_i32_0 = arith.constant 0 : i32
    %c0_i32_1 = arith.constant 0 : i32
    return %c0_i32, %c0_i32_0 : i32, i32
  }
  func.func @transform_10(%arg0: i32) -> (i32, i32, i32) {
    %c0_i32 = arith.constant 0 : i32
    %c0_i32_0 = arith.constant 0 : i32
    %c0_i32_1 = arith.constant 0 : i32
    return %arg0, %c0_i32, %c0_i32_0 : i32, i32, i32
  }
}

module attributes {stable_mosaic.version = 11 : i64} {
  func.func @_attn_block_kernel(%arg0: i32, %arg1: memref<1x8x32xf32, #tpu.memory_space<vmem>>, %arg2: memref<1x8x32xf32, #tpu.memory_space<vmem>>, %arg3: memref<32x32xf32, #tpu.memory_space<vmem>>, %arg4: memref<1x32xf32, #tpu.memory_space<vmem>>, %arg5: memref<32x64xf32, #tpu.memory_space<vmem>>, %arg6: memref<1x64xf32, #tpu.memory_space<vmem>>, %arg7: memref<32x32xf32, #tpu.memory_space<vmem>>, %arg8: memref<1x32xf32, #tpu.memory_space<vmem>>, %arg9: memref<1x32xf32, #tpu.memory_space<vmem>>, %arg10: memref<1x32xf32, #tpu.memory_space<vmem>>, %arg11: memref<1x8x32xf32, #tpu.memory_space<vmem>>) attributes {dimension_semantics = [#tpu.dimension_semantics<parallel>], iteration_bounds = array<i64: 2>, scalar_prefetch = 0 : i64, scratch_operands = 0 : i64, tpu.core_type = #tpu.core_type<tc>, window_params = [{transform_indices = @transform_0, window_bounds = array<i64: 1, 8, 32>}, {transform_indices = @transform_1, window_bounds = array<i64: 1, 8, 32>}, {pipeline_mode = #tpu.pipeline_mode<synchronous>, transform_indices = @transform_2, window_bounds = array<i64: 32, 32>}, {pipeline_mode = #tpu.pipeline_mode<synchronous>, transform_indices = @transform_3, window_bounds = array<i64: 1, 32>}, {pipeline_mode = #tpu.pipeline_mode<synchronous>, transform_indices = @transform_4, window_bounds = array<i64: 32, 64>}, {pipeline_mode = #tpu.pipeline_mode<synchronous>, transform_indices = @transform_5, window_bounds = array<i64: 1, 64>}, {pipeline_mode = #tpu.pipeline_mode<synchronous>, transform_indices = @transform_6, window_bounds = array<i64: 32, 32>}, {pipeline_mode = #tpu.pipeline_mode<synchronous>, transform_indices = @transform_7, window_bounds = array<i64: 1, 32>}, {pipeline_mode = #tpu.pipeline_mode<synchronous>, transform_indices = @transform_8, window_bounds = array<i64: 1, 32>}, {pipeline_mode = #tpu.pipeline_mode<synchronous>, transform_indices = @transform_9, window_bounds = array<i64: 1, 32>}, {transform_indices = @transform_10, window_bounds = array<i64: 1, 8, 32>}]} {
    %c0 = arith.constant 0 : index
    %c0_0 = arith.constant 0 : index
    %c0_1 = arith.constant 0 : index
    %0 = vector.load %arg1[%c0, %c0_0, %c0_1] : memref<1x8x32xf32, #tpu.memory_space<vmem>>, vector<1x8x32xf32>
    %1 = vector.shape_cast %0 : vector<1x8x32xf32> to vector<8x32xf32>
    %c0_2 = arith.constant 0 : index
    %c0_3 = arith.constant 0 : index
    %c0_4 = arith.constant 0 : index
    %2 = vector.load %arg2[%c0_2, %c0_3, %c0_4] : memref<1x8x32xf32, #tpu.memory_space<vmem>>, vector<1x8x32xf32>
    %3 = vector.shape_cast %2 : vector<1x8x32xf32> to vector<8x32xf32>
    %c0_5 = arith.constant 0 : index
    %c0_6 = arith.constant 0 : index
    %4 = vector.load %arg3[%c0_5, %c0_6] : memref<32x32xf32, #tpu.memory_space<vmem>>, vector<32x32xf32>
    %cst = arith.constant dense<0.000000e+00> : vector<8x32xf32>
    %5 = tpu.matmul %1, %4, %cst {dimension_numbers = #tpu.dot_dimension_numbers<[1], [0], [0], [1], [0, 0, 1, 1], [], []>} : vector<8x32xf32>, vector<32x32xf32>, vector<8x32xf32> -> vector<8x32xf32>
    %c0_7 = arith.constant 0 : index
    %c0_8 = arith.constant 0 : index
    %6 = vector.load %arg4[%c0_7, %c0_8] : memref<1x32xf32, #tpu.memory_space<vmem>>, vector<1x32xf32>
    %7 = vector.broadcast %6 : vector<1x32xf32> to vector<8x32xf32>
    %8 = arith.addf %5, %7 : vector<8x32xf32>
    %c0_9 = arith.constant 0 : index
    %c0_10 = arith.constant 0 : index
    %9 = vector.load %arg5[%c0_9, %c0_10] : memref<32x64xf32, #tpu.memory_space<vmem>>, vector<32x64xf32>
    %cst_11 = arith.constant dense<0.000000e+00> : vector<8x64xf32>
    %10 = tpu.matmul %3, %9, %cst_11 {dimension_numbers = #tpu.dot_dimension_numbers<[1], [0], [0], [1], [0, 0, 1, 1], [], []>} : vector<8x32xf32>, vector<32x64xf32>, vector<8x64xf32> -> vector<8x64xf32>
    %c0_12 = arith.constant 0 : index
    %c0_13 = arith.constant 0 : index
    %11 = vector.load %arg6[%c0_12, %c0_13] : memref<1x64xf32, #tpu.memory_space<vmem>>, vector<1x64xf32>
    %12 = vector.broadcast %11 : vector<1x64xf32> to vector<8x64xf32>
    %13 = arith.addf %10, %12 : vector<8x64xf32>
    %14 = vector.extract_strided_slice %13 {offsets = [0, 0], sizes = [8, 32], strides = [1, 1]} : vector<8x64xf32> to vector<8x32xf32>
    %15 = vector.extract_strided_slice %13 {offsets = [0, 32], sizes = [8, 32], strides = [1, 1]} : vector<8x64xf32> to vector<8x32xf32>
    %16 = vector.extract_strided_slice %8 {offsets = [0, 0], sizes = [8, 8], strides = [1, 1]} : vector<8x32xf32> to vector<8x8xf32>
    %17 = vector.extract_strided_slice %14 {offsets = [0, 0], sizes = [8, 8], strides = [1, 1]} : vector<8x32xf32> to vector<8x8xf32>
    %18 = vector.extract_strided_slice %15 {offsets = [0, 0], sizes = [8, 8], strides = [1, 1]} : vector<8x32xf32> to vector<8x8xf32>
    %cst_14 = arith.constant dense<0.000000e+00> : vector<8x8xf32>
    %19 = tpu.matmul %16, %17, %cst_14 {dimension_numbers = #tpu.dot_dimension_numbers<[1], [1], [0], [0], [0, 0, 1, 0], [], []>} : vector<8x8xf32>, vector<8x8xf32>, vector<8x8xf32> -> vector<8x8xf32>
    %cst_15 = arith.constant 0.353553385 : f32
    %20 = vector.broadcast %cst_15 : f32 to vector<8x8xf32>
    %21 = arith.mulf %19, %20 : vector<8x8xf32>
    %cst_16 = arith.constant dense<0xFF800000> : vector<8xf32>
    %22 = vector.multi_reduction <maximumf>, %21, %cst_16 [1] : vector<8x8xf32> to vector<8xf32>
    %23 = vector.shape_cast %22 : vector<8xf32> to vector<8x1xf32>
    %24 = vector.broadcast %23 : vector<8x1xf32> to vector<8x8xf32>
    %25 = arith.subf %21, %24 : vector<8x8xf32>
    %26 = math.exp %25 : vector<8x8xf32>
    %cst_17 = arith.constant dense<0.000000e+00> : vector<8xf32>
    %27 = vector.multi_reduction <add>, %26, %cst_17 [1] : vector<8x8xf32> to vector<8xf32>
    %28 = vector.shape_cast %27 : vector<8xf32> to vector<8x1xf32>
    %29 = tpu.reciprocal %28 {approx = true} : vector<8x1xf32> -> vector<8x1xf32>
    %30 = vector.broadcast %29 : vector<8x1xf32> to vector<8x8xf32>
    %31 = arith.mulf %26, %30 : vector<8x8xf32>
    %cst_18 = arith.constant dense<0.000000e+00> : vector<8x8xf32>
    %32 = tpu.matmul %31, %18, %cst_18 {dimension_numbers = #tpu.dot_dimension_numbers<[1], [0], [0], [1], [0, 0, 1, 1], [], []>} : vector<8x8xf32>, vector<8x8xf32>, vector<8x8xf32> -> vector<8x8xf32>
    %33 = vector.extract_strided_slice %8 {offsets = [0, 8], sizes = [8, 8], strides = [1, 1]} : vector<8x32xf32> to vector<8x8xf32>
    %34 = vector.extract_strided_slice %14 {offsets = [0, 8], sizes = [8, 8], strides = [1, 1]} : vector<8x32xf32> to vector<8x8xf32>
    %35 = vector.extract_strided_slice %15 {offsets = [0, 8], sizes = [8, 8], strides = [1, 1]} : vector<8x32xf32> to vector<8x8xf32>
    %cst_19 = arith.constant dense<0.000000e+00> : vector<8x8xf32>
    %36 = tpu.matmul %33, %34, %cst_19 {dimension_numbers = #tpu.dot_dimension_numbers<[1], [1], [0], [0], [0, 0, 1, 0], [], []>} : vector<8x8xf32>, vector<8x8xf32>, vector<8x8xf32> -> vector<8x8xf32>
    %cst_20 = arith.constant 0.353553385 : f32
    %37 = vector.broadcast %cst_20 : f32 to vector<8x8xf32>
    %38 = arith.mulf %36, %37 : vector<8x8xf32>
    %cst_21 = arith.constant dense<0xFF800000> : vector<8xf32>
    %39 = vector.multi_reduction <maximumf>, %38, %cst_21 [1] : vector<8x8xf32> to vector<8xf32>
    %40 = vector.shape_cast %39 : vector<8xf32> to vector<8x1xf32>
    %41 = vector.broadcast %40 : vector<8x1xf32> to vector<8x8xf32>
    %42 = arith.subf %38, %41 : vector<8x8xf32>
    %43 = math.exp %42 : vector<8x8xf32>
    %cst_22 = arith.constant dense<0.000000e+00> : vector<8xf32>
    %44 = vector.multi_reduction <add>, %43, %cst_22 [1] : vector<8x8xf32> to vector<8xf32>
    %45 = vector.shape_cast %44 : vector<8xf32> to vector<8x1xf32>
    %46 = tpu.reciprocal %45 {approx = true} : vector<8x1xf32> -> vector<8x1xf32>
    %47 = vector.broadcast %46 : vector<8x1xf32> to vector<8x8xf32>
    %48 = arith.mulf %43, %47 : vector<8x8xf32>
    %cst_23 = arith.constant dense<0.000000e+00> : vector<8x8xf32>
    %49 = tpu.matmul %48, %35, %cst_23 {dimension_numbers = #tpu.dot_dimension_numbers<[1], [0], [0], [1], [0, 0, 1, 1], [], []>} : vector<8x8xf32>, vector<8x8xf32>, vector<8x8xf32> -> vector<8x8xf32>
    %50 = vector.extract_strided_slice %8 {offsets = [0, 16], sizes = [8, 8], strides = [1, 1]} : vector<8x32xf32> to vector<8x8xf32>
    %51 = vector.extract_strided_slice %14 {offsets = [0, 16], sizes = [8, 8], strides = [1, 1]} : vector<8x32xf32> to vector<8x8xf32>
    %52 = vector.extract_strided_slice %15 {offsets = [0, 16], sizes = [8, 8], strides = [1, 1]} : vector<8x32xf32> to vector<8x8xf32>
    %cst_24 = arith.constant dense<0.000000e+00> : vector<8x8xf32>
    %53 = tpu.matmul %50, %51, %cst_24 {dimension_numbers = #tpu.dot_dimension_numbers<[1], [1], [0], [0], [0, 0, 1, 0], [], []>} : vector<8x8xf32>, vector<8x8xf32>, vector<8x8xf32> -> vector<8x8xf32>
    %cst_25 = arith.constant 0.353553385 : f32
    %54 = vector.broadcast %cst_25 : f32 to vector<8x8xf32>
    %55 = arith.mulf %53, %54 : vector<8x8xf32>
    %cst_26 = arith.constant dense<0xFF800000> : vector<8xf32>
    %56 = vector.multi_reduction <maximumf>, %55, %cst_26 [1] : vector<8x8xf32> to vector<8xf32>
    %57 = vector.shape_cast %56 : vector<8xf32> to vector<8x1xf32>
    %58 = vector.broadcast %57 : vector<8x1xf32> to vector<8x8xf32>
    %59 = arith.subf %55, %58 : vector<8x8xf32>
    %60 = math.exp %59 : vector<8x8xf32>
    %cst_27 = arith.constant dense<0.000000e+00> : vector<8xf32>
    %61 = vector.multi_reduction <add>, %60, %cst_27 [1] : vector<8x8xf32> to vector<8xf32>
    %62 = vector.shape_cast %61 : vector<8xf32> to vector<8x1xf32>
    %63 = tpu.reciprocal %62 {approx = true} : vector<8x1xf32> -> vector<8x1xf32>
    %64 = vector.broadcast %63 : vector<8x1xf32> to vector<8x8xf32>
    %65 = arith.mulf %60, %64 : vector<8x8xf32>
    %cst_28 = arith.constant dense<0.000000e+00> : vector<8x8xf32>
    %66 = tpu.matmul %65, %52, %cst_28 {dimension_numbers = #tpu.dot_dimension_numbers<[1], [0], [0], [1], [0, 0, 1, 1], [], []>} : vector<8x8xf32>, vector<8x8xf32>, vector<8x8xf32> -> vector<8x8xf32>
    %67 = vector.extract_strided_slice %8 {offsets = [0, 24], sizes = [8, 8], strides = [1, 1]} : vector<8x32xf32> to vector<8x8xf32>
    %68 = vector.extract_strided_slice %14 {offsets = [0, 24], sizes = [8, 8], strides = [1, 1]} : vector<8x32xf32> to vector<8x8xf32>
    %69 = vector.extract_strided_slice %15 {offsets = [0, 24], sizes = [8, 8], strides = [1, 1]} : vector<8x32xf32> to vector<8x8xf32>
    %cst_29 = arith.constant dense<0.000000e+00> : vector<8x8xf32>
    %70 = tpu.matmul %67, %68, %cst_29 {dimension_numbers = #tpu.dot_dimension_numbers<[1], [1], [0], [0], [0, 0, 1, 0], [], []>} : vector<8x8xf32>, vector<8x8xf32>, vector<8x8xf32> -> vector<8x8xf32>
    %cst_30 = arith.constant 0.353553385 : f32
    %71 = vector.broadcast %cst_30 : f32 to vector<8x8xf32>
    %72 = arith.mulf %70, %71 : vector<8x8xf32>
    %cst_31 = arith.constant dense<0xFF800000> : vector<8xf32>
    %73 = vector.multi_reduction <maximumf>, %72, %cst_31 [1] : vector<8x8xf32> to vector<8xf32>
    %74 = vector.shape_cast %73 : vector<8xf32> to vector<8x1xf32>
    %75 = vector.broadcast %74 : vector<8x1xf32> to vector<8x8xf32>
    %76 = arith.subf %72, %75 : vector<8x8xf32>
    %77 = math.exp %76 : vector<8x8xf32>
    %cst_32 = arith.constant dense<0.000000e+00> : vector<8xf32>
    %78 = vector.multi_reduction <add>, %77, %cst_32 [1] : vector<8x8xf32> to vector<8xf32>
    %79 = vector.shape_cast %78 : vector<8xf32> to vector<8x1xf32>
    %80 = tpu.reciprocal %79 {approx = true} : vector<8x1xf32> -> vector<8x1xf32>
    %81 = vector.broadcast %80 : vector<8x1xf32> to vector<8x8xf32>
    %82 = arith.mulf %77, %81 : vector<8x8xf32>
    %cst_33 = arith.constant dense<0.000000e+00> : vector<8x8xf32>
    %83 = tpu.matmul %82, %69, %cst_33 {dimension_numbers = #tpu.dot_dimension_numbers<[1], [0], [0], [1], [0, 0, 1, 1], [], []>} : vector<8x8xf32>, vector<8x8xf32>, vector<8x8xf32> -> vector<8x8xf32>
    %84 = tpu.concatenate %32, %49, %66, %83 in 1 : vector<8x8xf32>, vector<8x8xf32>, vector<8x8xf32>, vector<8x8xf32> -> vector<8x32xf32>
    %c0_34 = arith.constant 0 : index
    %c0_35 = arith.constant 0 : index
    %85 = vector.load %arg7[%c0_34, %c0_35] : memref<32x32xf32, #tpu.memory_space<vmem>>, vector<32x32xf32>
    %cst_36 = arith.constant dense<0.000000e+00> : vector<8x32xf32>
    %86 = tpu.matmul %84, %85, %cst_36 {dimension_numbers = #tpu.dot_dimension_numbers<[1], [0], [0], [1], [0, 0, 1, 1], [], []>} : vector<8x32xf32>, vector<32x32xf32>, vector<8x32xf32> -> vector<8x32xf32>
    %c0_37 = arith.constant 0 : index
    %c0_38 = arith.constant 0 : index
    %87 = vector.load %arg8[%c0_37, %c0_38] : memref<1x32xf32, #tpu.memory_space<vmem>>, vector<1x32xf32>
    %88 = vector.broadcast %87 : vector<1x32xf32> to vector<8x32xf32>
    %89 = arith.addf %86, %88 : vector<8x32xf32>
    %90 = arith.addf %89, %1 : vector<8x32xf32>
    %cst_39 = arith.constant dense<0.000000e+00> : vector<8xf32>
    %91 = vector.multi_reduction <add>, %90, %cst_39 [1] : vector<8x32xf32> to vector<8xf32>
    %92 = vector.shape_cast %91 : vector<8xf32> to vector<8x1xf32>
    %cst_40 = arith.constant 3.200000e+01 : f32
    %93 = vector.broadcast %cst_40 : f32 to vector<8x1xf32>
    %94 = arith.divf %92, %93 : vector<8x1xf32>
    %95 = vector.broadcast %94 : vector<8x1xf32> to vector<8x32xf32>
    %96 = arith.subf %90, %95 : vector<8x32xf32>
    %97 = arith.mulf %96, %96 : vector<8x32xf32>
    %cst_41 = arith.constant dense<0.000000e+00> : vector<8xf32>
    %98 = vector.multi_reduction <add>, %97, %cst_41 [1] : vector<8x32xf32> to vector<8xf32>
    %99 = vector.shape_cast %98 : vector<8xf32> to vector<8x1xf32>
    %cst_42 = arith.constant 3.200000e+01 : f32
    %100 = vector.broadcast %cst_42 : f32 to vector<8x1xf32>
    %101 = arith.divf %99, %100 : vector<8x1xf32>
    %102 = vector.broadcast %94 : vector<8x1xf32> to vector<8x32xf32>
    %103 = arith.subf %90, %102 : vector<8x32xf32>
    %cst_43 = arith.constant 9.99999974E-6 : f32
    %104 = vector.broadcast %cst_43 : f32 to vector<8x1xf32>
    %105 = arith.addf %101, %104 : vector<8x1xf32>
    %106 = math.rsqrt %105 : vector<8x1xf32>
    %107 = vector.broadcast %106 : vector<8x1xf32> to vector<8x32xf32>
    %108 = arith.mulf %103, %107 : vector<8x32xf32>
    %c0_44 = arith.constant 0 : index
    %c0_45 = arith.constant 0 : index
    %109 = vector.load %arg9[%c0_44, %c0_45] : memref<1x32xf32, #tpu.memory_space<vmem>>, vector<1x32xf32>
    %110 = vector.broadcast %109 : vector<1x32xf32> to vector<8x32xf32>
    %111 = arith.mulf %108, %110 : vector<8x32xf32>
    %c0_46 = arith.constant 0 : index
    %c0_47 = arith.constant 0 : index
    %112 = vector.load %arg10[%c0_46, %c0_47] : memref<1x32xf32, #tpu.memory_space<vmem>>, vector<1x32xf32>
    %113 = vector.broadcast %112 : vector<1x32xf32> to vector<8x32xf32>
    %114 = arith.addf %111, %113 : vector<8x32xf32>
    %c0_48 = arith.constant 0 : index
    %c0_49 = arith.constant 0 : index
    %c0_50 = arith.constant 0 : index
    %115 = vector.load %arg11[%c0_48, %c0_49, %c0_50] : memref<1x8x32xf32, #tpu.memory_space<vmem>>, vector<1x8x32xf32>
    %116 = vector.shape_cast %115 : vector<1x8x32xf32> to vector<8x32xf32>
    %117 = vector.shape_cast %114 : vector<8x32xf32> to vector<1x8x32xf32>
    tpu.vector_store %arg11[%c0_48, %c0_49, %c0_50], %117 {strides = array<i32>} : memref<1x8x32xf32, #tpu.memory_space<vmem>>, vector<1x8x32xf32>,
    return
  }
  func.func @transform_0(%arg0: i32) -> (i32, i32, i32) {
    %c0_i32 = arith.constant 0 : i32
    %c0_i32_0 = arith.constant 0 : i32
    %c0_i32_1 = arith.constant 0 : i32
    return %arg0, %c0_i32, %c0_i32_0 : i32, i32, i32
  }
  func.func @transform_1(%arg0: i32) -> (i32, i32, i32) {
    %c0_i32 = arith.constant 0 : i32
    %c0_i32_0 = arith.constant 0 : i32
    %c0_i32_1 = arith.constant 0 : i32
    return %arg0, %c0_i32, %c0_i32_0 : i32, i32, i32
  }
  func.func @transform_2(%arg0: i32) -> (i32, i32) {
    %c0_i32 = arith.constant 0 : i32
    %c0_i32_0 = arith.constant 0 : i32
    %c0_i32_1 = arith.constant 0 : i32
    return %c0_i32, %c0_i32_0 : i32, i32
  }
  func.func @transform_3(%arg0: i32) -> (i32, i32) {
    %c0_i32 = arith.constant 0 : i32
    %c0_i32_0 = arith.constant 0 : i32
    %c0_i32_1 = arith.constant 0 : i32
    return %c0_i32, %c0_i32_0 : i32, i32
  }
  func.func @transform_4(%arg0: i32) -> (i32, i32) {
    %c0_i32 = arith.constant 0 : i32
    %c0_i32_0 = arith.constant 0 : i32
    %c0_i32_1 = arith.constant 0 : i32
    return %c0_i32, %c0_i32_0 : i32, i32
  }
  func.func @transform_5(%arg0: i32) -> (i32, i32) {
    %c0_i32 = arith.constant 0 : i32
    %c0_i32_0 = arith.constant 0 : i32
    %c0_i32_1 = arith.constant 0 : i32
    return %c0_i32, %c0_i32_0 : i32, i32
  }
  func.func @transform_6(%arg0: i32) -> (i32, i32) {
    %c0_i32 = arith.constant 0 : i32
    %c0_i32_0 = arith.constant 0 : i32
    %c0_i32_1 = arith.constant 0 : i32
    return %c0_i32, %c0_i32_0 : i32, i32
  }
  func.func @transform_7(%arg0: i32) -> (i32, i32) {
    %c0_i32 = arith.constant 0 : i32
    %c0_i32_0 = arith.constant 0 : i32
    %c0_i32_1 = arith.constant 0 : i32
    return %c0_i32, %c0_i32_0 : i32, i32
  }
  func.func @transform_8(%arg0: i32) -> (i32, i32) {
    %c0_i32 = arith.constant 0 : i32
    %c0_i32_0 = arith.constant 0 : i32
    %c0_i32_1 = arith.constant 0 : i32
    return %c0_i32, %c0_i32_0 : i32, i32
  }
  func.func @transform_9(%arg0: i32) -> (i32, i32) {
    %c0_i32 = arith.constant 0 : i32
    %c0_i32_0 = arith.constant 0 : i32
    %c0_i32_1 = arith.constant 0 : i32
    return %c0_i32, %c0_i32_0 : i32, i32
  }
  func.func @transform_10(%arg0: i32) -> (i32, i32, i32) {
    %c0_i32 = arith.constant 0 : i32
    %c0_i32_0 = arith.constant 0 : i32
    %c0_i32_1 = arith.constant 0 : i32
    return %arg0, %c0_i32, %c0_i32_0 : i32, i32, i32
  }
}

</mosaic_0001>

<llo_original>
// kernel: decoder_forward.5
$region0: #{decoder_forward.5}
  #allocation0 [shape = 'u32[]', space=smem, size = 0x4, offset = 0x4, fixed_abs, tag = 'smem constant byte address 0x4 - core index']
  #allocation1 [shape = 'u32[72,128]{1,0:T(1,128)}', space=vmem, size = 0x9000, scoped, tag = 'internal scratch']
  %s0 = inlined_call_operand.vmem [shape: f32[16,32], index: 0, kind: input, shape index: {}]
  %s1 = inlined_call_operand.vmem [shape: f32[32,128], index: 1, kind: input, shape index: {}]
  %s2 = inlined_call_operand.vmem [shape: f32[1,128], index: 2, kind: input, shape index: {}]
  %s3 = inlined_call_operand.vmem [shape: f32[128,32], index: 3, kind: input, shape index: {}]
  %s4 = inlined_call_operand.vmem [shape: f32[1,32], index: 4, kind: input, shape index: {}]
  %s5 = inlined_call_operand.vmem [shape: f32[1,32], index: 5, kind: input, shape index: {}]
  %s6 = inlined_call_operand.vmem [shape: f32[1,32], index: 6, kind: input, shape index: {}]
  %s7 = inlined_call_operand.hbm [shape: f32[16,32], index: 7, kind: output, shape index: {}]
  %s8 = sld [smem:[#allocation0]]
  $region38: #{decoder_forward.5} parent=0
    _
  %s10 = ssub.s32 1, %s8
  %s11 = scalar_select 0, %s10, %s8
  $region1: #{decoder_forward.5} parent=0
    #allocation2 [shape = 'u8[8192]{0}', space=vmem, size = 0x2000, scoped, tag = 'output window, operand 0, single buffered']
    #allocation3 [shape = 's32[1]{0}', space=sflag, size = 0x4, scoped, tag = 'scoped memory for decoder_forward.5']
    %12 = vsyncpa [#allocation3], 0
    // Predicated region
    $region2: #{decoder_forward.5} parent=1 // pred_check
      _
    $region3: #{decoder_forward.5} parent=1 // pred_check_branch
      %14 = sbr.rel (0) target = $region5
    $region4: #{decoder_forward.5} parent=1 // pred_region
      _
    $region5: #{decoder_forward.5} parent=1 // pred_fallthru
      _
    // Predicated region
    $region6: #{decoder_forward.5} parent=1 // pred_check
      _
    $region7: #{decoder_forward.5} parent=1 // pred_check_branch
      %16 = sbr.rel (0) target = $region9
    $region8: #{decoder_forward.5} parent=1 // pred_region
      _
    $region9: #{decoder_forward.5} parent=1 // pred_fallthru
      _
    // Predicated region
    $region10: #{decoder_forward.5} parent=1 // pred_check
      _
    $region11: #{decoder_forward.5} parent=1 // pred_check_branch
      %18 = sbr.rel (0) target = $region13
    $region12: #{decoder_forward.5} parent=1 // pred_region
      _
    $region13: #{decoder_forward.5} parent=1 // pred_fallthru
      _
    // Predicated region
    $region14: #{decoder_forward.5} parent=1 // pred_check
      _
    $region15: #{decoder_forward.5} parent=1 // pred_check_branch
      %20 = sbr.rel (0) target = $region17
    $region16: #{decoder_forward.5} parent=1 // pred_region
      _
    $region17: #{decoder_forward.5} parent=1 // pred_fallthru
      _
    // Predicated region
    $region18: #{decoder_forward.5} parent=1 // pred_check
      _
    $region19: #{decoder_forward.5} parent=1 // pred_check_branch
      %22 = sbr.rel (0) target = $region21
    $region20: #{decoder_forward.5} parent=1 // pred_region
      _
    $region21: #{decoder_forward.5} parent=1 // pred_fallthru
      _
    // Predicated region
    $region22: #{decoder_forward.5} parent=1 // pred_check
      _
    $region23: #{decoder_forward.5} parent=1 // pred_check_branch
      %24 = sbr.rel (0) target = $region25
    $region24: #{decoder_forward.5} parent=1 // pred_region
      _
    $region25: #{decoder_forward.5} parent=1 // pred_fallthru
      _
    // Predicated region
    $region26: #{decoder_forward.5} parent=1 // pred_check
      _
    $region27: #{decoder_forward.5} parent=1 // pred_check_branch
      %26 = sbr.rel (0) target = $region29
    $region28: #{decoder_forward.5} parent=1 // pred_region
      _
    $region29: #{decoder_forward.5} parent=1 // pred_fallthru
      _
    %v27 = vld [vmem:[%s0] sm:$0xff]
    %v28 = vld [vmem:[%s0 + $0x8] sm:$0xff]
    %v29 = vld [vmem:[%s1] sm:$0xff]
    %v30 = vld [vmem:[%s1 + $0x8] sm:$0xff]
    %v31 = vld [vmem:[%s1 + $0x10] sm:$0xff]
    %v32 = vld [vmem:[%s1 + $0x18] sm:$0xff]
    %v33 = vld [vmem:[%s2] sm:$0x1]
    %v35 = vperm.slane %v33, 0
    %vm37 = vcmask 261120
    %v39 = vsel %vm37, %v27, 0
    %v42 = vsel %vm37, %v28, 0
    %44 = vmatpush.msra.mxu0 0.0
    %45 = vmatpush.msra.mxu0 0.0
    %46 = vmatpush.msra.mxu0 0.0
    %47 = vmatpush.msra.mxu0 0.0
    %48 = vmatpush.msra.mxu0 0.0
    %49 = vmatpush.msra.mxu0 0.0
    %50 = vmatpush.msra.mxu0 0.0
    %51 = vmatpush.msra.mxu0 0.0
    %52 = vmatpush.msra.mxu0 0.0
    %53 = vmatpush.msra.mxu0 0.0
    %54 = vmatpush.msra.mxu0 0.0
    %55 = vmatpush.msra.mxu0 0.0
    %56 = vmatpush.msra.mxu0 %v32
    %57 = vmatpush.msra.mxu0 %v31
    %58 = vmatpush.msra.mxu0 %v30
    %59 = vmatpush.msra.mxu0 %v29
    %60 = vmatmul.f32.gmra.mxu0 %v39
    %v61 = vpop.f32.mrf.mxu0
    %v62 = vadd.f32 %v35, %v61
    %63 = vmatmul.f32.gmra.mxu0 %v42
    %v64 = vpop.f32.mrf.mxu0
    %v65 = vadd.f32 %v35, %v64
    %66 = vdwg.mxu0
    %v67 = vmax.f32 %v62, 0.0
    %v68 = vmax.f32 %v65, 0.0
    %v69 = vld [vmem:[%s3] sm:$0xff]
    %v70 = vld [vmem:[%s3 + $0x8] sm:$0xff]
    %v71 = vld [vmem:[%s3 + $0x10] sm:$0xff]
    %v72 = vld [vmem:[%s3 + $0x18] sm:$0xff]
    %v73 = vld [vmem:[%s3 + $0x20] sm:$0xff]
    %v74 = vld [vmem:[%s3 + $0x28] sm:$0xff]
    %v75 = vld [vmem:[%s3 + $0x30] sm:$0xff]
    %v76 = vld [vmem:[%s3 + $0x38] sm:$0xff]
    %v77 = vld [vmem:[%s3 + $0x40] sm:$0xff]
    %v78 = vld [vmem:[%s3 + $0x48] sm:$0xff]
    %v79 = vld [vmem:[%s3 + $0x50] sm:$0xff]
    %v80 = vld [vmem:[%s3 + $0x58] sm:$0xff]
    %v81 = vld [vmem:[%s3 + $0x60] sm:$0xff]
    %v82 = vld [vmem:[%s3 + $0x68] sm:$0xff]
    %v83 = vld [vmem:[%s3 + $0x70] sm:$0xff]
    %v84 = vld [vmem:[%s3 + $0x78] sm:$0xff]
    %v85 = vld [vmem:[%s4] sm:$0x1]
    %v87 = vperm.slane %v85, 0
    %89 = vmatpush.msra.mxu0 %v84
    %90 = vmatpush.msra.mxu0 %v83
    %91 = vmatpush.msra.mxu0 %v82
    %92 = vmatpush.msra.mxu0 %v81
    %93 = vmatpush.msra.mxu0 %v80
    %94 = vmatpush.msra.mxu0 %v79
    %95 = vmatpush.msra.mxu0 %v78
    %96 = vmatpush.msra.mxu0 %v77
    %97 = vmatpush.msra.mxu0 %v76
    %98 = vmatpush.msra.mxu0 %v75
    %99 = vmatpush.msra.mxu0 %v74
    %100 = vmatpush.msra.mxu0 %v73
    %101 = vmatpush.msra.mxu0 %v72
    %102 = vmatpush.msra.mxu0 %v71
    %103 = vmatpush.msra.mxu0 %v70
    %104 = vmatpush.msra.mxu0 %v69
    %105 = vmatmul.f32.gmra.mxu0 %v67
    %v106 = vpop.f32.mrf.mxu0
    %v107 = vadd.f32 %v87, %v106
    %108 = vmatmul.f32.gmra.mxu0 %v68
    %v109 = vpop.f32.mrf.mxu0
    %v110 = vadd.f32 %v87, %v109
    %111 = vdwg.mxu0
    %v112 = vadd.f32 %v107, %v27
    %v113 = vadd.f32 %v110, %v28
    %v114 = vsel %vm37, %v112, 0.0
    %115 = vadd.xlane.f32.xlu0 %v114
    %v116 = vpop.xlane.xlu0 %115
    %v117 = vsel %vm37, %v113, 0.0
    %118 = vadd.xlane.f32.xlu0 %v117
    %v119 = vpop.xlane.xlu0 %118
    %v120 = vrcp.pop 32.0
    %v121 = vmul.f32 32.0, %v120
    %v122 = vsub.f32 1.0, %v121
    %v123 = vmul.f32 %v120, %v122
    %v124 = vadd.f32 %v120, %v123
    %vm125 = vweird.f32 %v120
    %v126 = vsel %vm125, %v120, %v124
    %v127 = vmul.f32 %v116, %v126
    %v128 = vmul.f32 %v119, %v126
    %v129 = vsub.f32 %v112, %v127
    %v130 = vsub.f32 %v113, %v128
    %v131 = vmul.f32 %v129, %v129
    %v132 = vmul.f32 %v130, %v130
    %v133 = vsel %vm37, %v131, 0.0
    %134 = vadd.xlane.f32.xlu0 %v133
    %v135 = vpop.xlane.xlu0 %134
    %v136 = vsel %vm37, %v132, 0.0
    %137 = vadd.xlane.f32.xlu0 %v136
    %v138 = vpop.xlane.xlu0 %137
    %v139 = vmul.f32 %v135, %v126
    %v140 = vmul.f32 %v138, %v126
    %v141 = vadd.f32 %v139, 1e-05
    %v142 = vadd.f32 %v140, 1e-05
    %v143 = vrsqrt.pop %v141
    %v144 = vmul.f32 %v143, %v141
    %v145 = vmul.f32 %v144, %v143
    %v146 = vmul.f32 0.5, %v145
    %v147 = vsub.f32 1.5, %v146
    %v148 = vmul.f32 %v143, %v147
    %vm149 = vweird.f32 %v141
    %vm150 = vweird.f32 %v143
    %vm151 = vmor %vm149, %vm150
    %v152 = vsel %vm151, %v143, %v148
    %v153 = vrsqrt.pop %v142
    %v154 = vmul.f32 %v153, %v142
    %v155 = vmul.f32 %v154, %v153
    %v156 = vmul.f32 0.5, %v155
    %v157 = vsub.f32 1.5, %v156
    %v158 = vmul.f32 %v153, %v157
    %vm159 = vweird.f32 %v142
    %vm160 = vweird.f32 %v153
    %vm161 = vmor %vm159, %vm160
    %v162 = vsel %vm161, %v153, %v158
    %v163 = vmul.f32 %v129, %v152
    %v164 = vmul.f32 %v130, %v162
    %v165 = vld [vmem:[%s5] sm:$0x1]
    %v167 = vperm.slane %v165, 0
    %v169 = vmul.f32 %v163, %v167
    %v170 = vmul.f32 %v164, %v167
    %v171 = vld [vmem:[%s6] sm:$0x1]
    %v173 = vperm.slane %v171, 0
    %v175 = vadd.f32 %v169, %v173
    %v176 = vadd.f32 %v170, %v173
    %177 = vst.msk [vmem:[#allocation2] sm:$0xff] %vm37, %v175
    %178 = vst.msk [vmem:[#allocation2 + $0x8] sm:$0xff] %vm37, %v176
    // Predicated region
    $region30: #{decoder_forward.5} parent=1 // pred_check
      _
    $region31: #{decoder_forward.5} parent=1 // pred_check_branch
      %180 = sbr.rel (0) target = $region33
    $region32: #{decoder_forward.5} parent=1 // pred_region
      %182 = vsyncadd [#allocation3], 0
      %s183 = sshll.u32 [#allocation2], 4
      %s184 = int_to_ptr.vmem [resolvable:$true] %s183
      %s185 = sshll.u32 %s7, 4
      %s186 = int_to_ptr.hbm [resolvable:$true] %s185
      %191 = dma.vmem_to_hbm [thread:$0]  %s184, 256, %s186, [#allocation3], 128, 128, 8
    $region33: #{decoder_forward.5} parent=1 // pred_fallthru
      _
    // Predicated region
    $region34: #{decoder_forward.5} parent=1 // pred_check
      _
    $region35: #{decoder_forward.5} parent=1 // pred_check_branch
      %193 = sbr.rel (0) target = $region37
    $region36: #{decoder_forward.5} parent=1 // pred_region
      %195 = dma.done [#allocation3], 256
    $region37: #{decoder_forward.5} parent=1 // pred_fallthru
      _
    %196 = vsyncpa [#allocation3], 1

// kernel: decoder_forward.3
$region0: #{decoder_forward.3}
  #allocation0 [shape = 'u32[]', space=smem, size = 0x4, offset = 0x4, fixed_abs, tag = 'smem constant byte address 0x4 - core index']
  #allocation1 [shape = 'u32[72,128]{1,0:T(1,128)}', space=vmem, size = 0x9000, scoped, tag = 'internal scratch']
  %s0 = inlined_call_operand.hbm [shape: f32[2,8,32], index: 0, kind: input, shape index: {}, may-alias: {0,1}]
  %s1 = inlined_call_operand.hbm [shape: f32[2,8,32], index: 1, kind: input, shape index: {}, may-alias: {0,1}]
  %s2 = inlined_call_operand.hbm [shape: f32[32,32], index: 2, kind: input, shape index: {}]
  %s3 = inlined_call_operand.vmem [shape: f32[1,32], index: 3, kind: input, shape index: {}]
  %s4 = inlined_call_operand.hbm [shape: f32[32,64], index: 4, kind: input, shape index: {}]
  %s5 = inlined_call_operand.vmem [shape: f32[1,64], index: 5, kind: input, shape index: {}]
  %s6 = inlined_call_operand.hbm [shape: f32[32,32], index: 6, kind: input, shape index: {}]
  %s7 = inlined_call_operand.vmem [shape: f32[1,32], index: 7, kind: input, shape index: {}]
  %s8 = inlined_call_operand.hbm [shape: f32[1,32], index: 8, kind: input, shape index: {}]
  %s9 = inlined_call_operand.hbm [shape: f32[1,32], index: 9, kind: input, shape index: {}]
  %s10 = inlined_call_operand.vmem [shape: f32[2,8,32], index: 10, kind: output, shape index: {}]
  %s11 = sld [smem:[#allocation0]]
  $region101: #{decoder_forward.3} parent=0
    _
  %s13 = ssub.s32 1, %s11
  %s14 = scalar_select 0, %s13, %s11
  $region1: #{decoder_forward.3} parent=0
    #allocation2 [shape = 'u8[8192]{0}', space=vmem, size = 0x2000, scoped, tag = 'input window, operand 0']
    #allocation3 [shape = 's32[2]{0}', space=sflag, size = 0x8, scoped, tag = 'scoped memory for decoder_forward.3']
    #allocation4 [shape = 'u8[8192]{0}', space=vmem, size = 0x2000, scoped, tag = 'input window, operand 1']
    #allocation5 [shape = 's32[2]{0}', space=sflag, size = 0x8, scoped, tag = 'scoped memory for decoder_forward.3']
    #allocation6 [shape = 'u8[16384]{0}', space=vmem, size = 0x4000, scoped, tag = 'input window, operand 2, single buffered']
    #allocation7 [shape = 'u8[16384]{0}', space=vmem, size = 0x4000, scoped, tag = 'input window, operand 4, single buffered']
    #allocation8 [shape = 's32[1]{0}', space=sflag, size = 0x4, scoped, tag = 'scoped memory for decoder_forward.3']
    #allocation9 [shape = 'u8[16384]{0}', space=vmem, size = 0x4000, scoped, tag = 'input window, operand 6, single buffered']
    #allocation10 [shape = 'u8[512]{0}', space=vmem, size = 0x400, scoped, tag = 'input window, operand 8, single buffered']
    #allocation11 [shape = 's32[1]{0}', space=sflag, size = 0x4, scoped, tag = 'scoped memory for decoder_forward.3']
    #allocation12 [shape = 'u8[512]{0}', space=vmem, size = 0x400, scoped, tag = 'input window, operand 9, single buffered']
    %15 = vsyncpa [#allocation3], 0
    %s16 = scalar_lea.sflag [#allocation3], 1
    %17 = vsyncpa %s16, 0
    %18 = vsyncpa [#allocation5], 0
    %s19 = scalar_lea.sflag [#allocation5], 1
    %20 = vsyncpa %s19, 0
    %21 = vsyncpa [#allocation8], 0
    %22 = vsyncpa [#allocation11], 0
    loop: start=0, step=1, limit=4
    $region2: #{decoder_forward.3} parent=1 // loop_pre_header
      _
    $region3: #{decoder_forward.3} parent=1 // loop_header
      %s24 = sphi 0, %s28
      %p25 = scmp.ge.s32.totalorder %s24, 4
      %s34 = sphi 0, %s36
      %s37 = sphi 0, %s34
      %s38 = sphi 0, %s37
      %s54 = sphi 0, %s38
      %s60 = sphi 0, %s62
      %s63 = sphi 0, %s60
      %s64 = sphi 0, %s63
      %s80 = sphi 0, %s64
      %s84 = sphi 0, %s84
      %s86 = sphi 0, %s84
      %s87 = sphi 0, %s86
      %s101 = sphi 0, %s87
      %s105 = sphi 0, %s105
      %s107 = sphi 0, %s105
      %s108 = sphi 0, %s107
      %s122 = sphi 0, %s108
      %s126 = sphi 0, %s126
      %s128 = sphi 0, %s126
      %s129 = sphi 0, %s128
      %s143 = sphi 0, %s129
      %s147 = sphi 0, %s147
      %s149 = sphi 0, %s147
      %s150 = sphi 0, %s149
      %s164 = sphi 0, %s150
      %s168 = sphi 0, %s168
      %s170 = sphi 0, %s168
      %s171 = sphi 0, %s170
      %s185 = sphi 0, %s171
      %s189 = sphi 0, %s189
      %s191 = sphi 0, %s189
      %s192 = sphi 0, %s191
      %s206 = sphi 0, %s192
      %s210 = sphi 0, %s210
      %s212 = sphi 0, %s210
      %s213 = sphi 0, %s212
      %s227 = sphi 0, %s213
      %s231 = sphi 0, %s231
      %s233 = sphi 0, %s231
      %s234 = sphi 0, %s233
      %s248 = sphi 0, %s234
      %s254 = sphi 0, %s256
      %s257 = sphi 0, %s254
      %s258 = sphi 0, %s257
      %s274 = sphi 0, %s258
    $region4: #{decoder_forward.3} parent=1 // loop_header_branch
      %27 = sbr.rel (%p25) target = $region8
    $region5: #{decoder_forward.3} parent=1 // loop_body
      %s29 = ssub.s32 %s24, 1
      %s30 = ssub.s32 %s24, 2
      %s31 = sadd.s32 %s24, 1
      %s32 = ssub.s32 %s24, %s31
      %p33 = scmp.eq.s32.totalorder %s32, 0
      %s35 = sadd.s32 %s34, 1
      %s36 = scalar_select %p33, %s34, %s35
      %p39 = pneg %p33
      %p40 = scmp.eq.s32.totalorder %s24, 1
      %p41 = por %p39, %p40
      %p42 = scmp.ne.s32.totalorder %s34, %s37
      %p43 = scmp.eq.s32.totalorder %s24, 0
      %p44 = por %p42, %p43
      %p45 = scmp.ne.s32.totalorder %s34, %s37
      %p46 = scmp.eq.s32.totalorder %s29, 1
      %p47 = por %p45, %p46
      %p48 = scmp.ne.s32.totalorder %s37, %s38
      %p49 = scmp.eq.s32.totalorder %s29, 0
      %p50 = por %p48, %p49
      %p51 = scmp.ne.s32.totalorder %s37, %s38
      %p52 = scmp.eq.s32.totalorder %s30, 1
      %p53 = por %p51, %p52
      %p55 = scmp.ne.s32.totalorder %s38, %s54
      %p56 = scmp.eq.s32.totalorder %s30, 0
      %p57 = por %p55, %p56
      %s58 = ssub.s32 %s24, %s31
      %p59 = scmp.eq.s32.totalorder %s58, 0
      %s61 = sadd.s32 %s60, 1
      %s62 = scalar_select %p59, %s60, %s61
      %p65 = pneg %p59
      %p66 = scmp.eq.s32.totalorder %s24, 1
      %p67 = por %p65, %p66
      %p68 = scmp.ne.s32.totalorder %s60, %s63
      %p69 = scmp.eq.s32.totalorder %s24, 0
      %p70 = por %p68, %p69
      %p71 = scmp.ne.s32.totalorder %s60, %s63
      %p72 = scmp.eq.s32.totalorder %s29, 1
      %p73 = por %p71, %p72
      %p74 = scmp.ne.s32.totalorder %s63, %s64
      %p75 = scmp.eq.s32.totalorder %s29, 0
      %p76 = por %p74, %p75
      %p77 = scmp.ne.s32.totalorder %s63, %s64
      %p78 = scmp.eq.s32.totalorder %s30, 1
      %p79 = por %p77, %p78
      %p81 = scmp.ne.s32.totalorder %s64, %s80
      %p82 = scmp.eq.s32.totalorder %s30, 0
      %p83 = por %p81, %p82
      %s85 = sadd.s32 %s84, 1
      %p88 = scmp.eq.s32.totalorder %s24, 1
      %p89 = scmp.ne.s32.totalorder %s84, %s86
      %p90 = scmp.eq.s32.totalorder %s24, 0
      %p91 = por %p89, %p90
      %p92 = scmp.ne.s32.totalorder %s84, %s86
      %p93 = scmp.eq.s32.totalorder %s29, 1
      %p94 = por %p92, %p93
      %p95 = scmp.ne.s32.totalorder %s86, %s87
      %p96 = scmp.eq.s32.totalorder %s29, 0
      %p97 = por %p95, %p96
      %p98 = scmp.ne.s32.totalorder %s86, %s87
      %p99 = scmp.eq.s32.totalorder %s30, 1
      %p100 = por %p98, %p99
      %p102 = scmp.ne.s32.totalorder %s87, %s101
      %p103 = scmp.eq.s32.totalorder %s30, 0
      %p104 = por %p102, %p103
      %s106 = sadd.s32 %s105, 1
      %p109 = scmp.eq.s32.totalorder %s24, 1
      %p110 = scmp.ne.s32.totalorder %s105, %s107
      %p111 = scmp.eq.s32.totalorder %s24, 0
      %p112 = por %p110, %p111
      %p113 = scmp.ne.s32.totalorder %s105, %s107
      %p114 = scmp.eq.s32.totalorder %s29, 1
      %p115 = por %p113, %p114
      %p116 = scmp.ne.s32.totalorder %s107, %s108
      %p117 = scmp.eq.s32.totalorder %s29, 0
      %p118 = por %p116, %p117
      %p119 = scmp.ne.s32.totalorder %s107, %s108
      %p120 = scmp.eq.s32.totalorder %s30, 1
      %p121 = por %p119, %p120
      %p123 = scmp.ne.s32.totalorder %s108, %s122
      %p124 = scmp.eq.s32.totalorder %s30, 0
      %p125 = por %p123, %p124
      %s127 = sadd.s32 %s126, 1
      %p130 = scmp.eq.s32.totalorder %s24, 1
      %p131 = scmp.ne.s32.totalorder %s126, %s128
      %p132 = scmp.eq.s32.totalorder %s24, 0
      %p133 = por %p131, %p132
      %p134 = scmp.ne.s32.totalorder %s126, %s128
      %p135 = scmp.eq.s32.totalorder %s29, 1
      %p136 = por %p134, %p135
      %p137 = scmp.ne.s32.totalorder %s128, %s129
      %p138 = scmp.eq.s32.totalorder %s29, 0
      %p139 = por %p137, %p138
      %p140 = scmp.ne.s32.totalorder %s128, %s129
      %p141 = scmp.eq.s32.totalorder %s30, 1
      %p142 = por %p140, %p141
      %p144 = scmp.ne.s32.totalorder %s129, %s143
      %p145 = scmp.eq.s32.totalorder %s30, 0
      %p146 = por %p144, %p145
      %s148 = sadd.s32 %s147, 1
      %p151 = scmp.eq.s32.totalorder %s24, 1
      %p152 = scmp.ne.s32.totalorder %s147, %s149
      %p153 = scmp.eq.s32.totalorder %s24, 0
      %p154 = por %p152, %p153
      %p155 = scmp.ne.s32.totalorder %s147, %s149
      %p156 = scmp.eq.s32.totalorder %s29, 1
      %p157 = por %p155, %p156
      %p158 = scmp.ne.s32.totalorder %s149, %s150
      %p159 = scmp.eq.s32.totalorder %s29, 0
      %p160 = por %p158, %p159
      %p161 = scmp.ne.s32.totalorder %s149, %s150
      %p162 = scmp.eq.s32.totalorder %s30, 1
      %p163 = por %p161, %p162
      %p165 = scmp.ne.s32.totalorder %s150, %s164
      %p166 = scmp.eq.s32.totalorder %s30, 0
      %p167 = por %p165, %p166
      %s169 = sadd.s32 %s168, 1
      %p172 = scmp.eq.s32.totalorder %s24, 1
      %p173 = scmp.ne.s32.totalorder %s168, %s170
      %p174 = scmp.eq.s32.totalorder %s24, 0
      %p175 = por %p173, %p174
      %p176 = scmp.ne.s32.totalorder %s168, %s170
      %p177 = scmp.eq.s32.totalorder %s29, 1
      %p178 = por %p176, %p177
      %p179 = scmp.ne.s32.totalorder %s170, %s171
      %p180 = scmp.eq.s32.totalorder %s29, 0
      %p181 = por %p179, %p180
      %p182 = scmp.ne.s32.totalorder %s170, %s171
      %p183 = scmp.eq.s32.totalorder %s30, 1
      %p184 = por %p182, %p183
      %p186 = scmp.ne.s32.totalorder %s171, %s185
      %p187 = scmp.eq.s32.totalorder %s30, 0
      %p188 = por %p186, %p187
      %s190 = sadd.s32 %s189, 1
      %p193 = scmp.eq.s32.totalorder %s24, 1
      %p194 = scmp.ne.s32.totalorder %s189, %s191
      %p195 = scmp.eq.s32.totalorder %s24, 0
      %p196 = por %p194, %p195
      %p197 = scmp.ne.s32.totalorder %s189, %s191
      %p198 = scmp.eq.s32.totalorder %s29, 1
      %p199 = por %p197, %p198
      %p200 = scmp.ne.s32.totalorder %s191, %s192
      %p201 = scmp.eq.s32.totalorder %s29, 0
      %p202 = por %p200, %p201
      %p203 = scmp.ne.s32.totalorder %s191, %s192
      %p204 = scmp.eq.s32.totalorder %s30, 1
      %p205 = por %p203, %p204
      %p207 = scmp.ne.s32.totalorder %s192, %s206
      %p208 = scmp.eq.s32.totalorder %s30, 0
      %p209 = por %p207, %p208
      %s211 = sadd.s32 %s210, 1
      %p214 = scmp.eq.s32.totalorder %s24, 1
      %p215 = scmp.ne.s32.totalorder %s210, %s212
      %p216 = scmp.eq.s32.totalorder %s24, 0
      %p217 = por %p215, %p216
      %p218 = scmp.ne.s32.totalorder %s210, %s212
      %p219 = scmp.eq.s32.totalorder %s29, 1
      %p220 = por %p218, %p219
      %p221 = scmp.ne.s32.totalorder %s212, %s213
      %p222 = scmp.eq.s32.totalorder %s29, 0
      %p223 = por %p221, %p222
      %p224 = scmp.ne.s32.totalorder %s212, %s213
      %p225 = scmp.eq.s32.totalorder %s30, 1
      %p226 = por %p224, %p225
      %p228 = scmp.ne.s32.totalorder %s213, %s227
      %p229 = scmp.eq.s32.totalorder %s30, 0
      %p230 = por %p228, %p229
      %s232 = sadd.s32 %s231, 1
      %p235 = scmp.eq.s32.totalorder %s24, 1
      %p236 = scmp.ne.s32.totalorder %s231, %s233
      %p237 = scmp.eq.s32.totalorder %s24, 0
      %p238 = por %p236, %p237
      %p239 = scmp.ne.s32.totalorder %s231, %s233
      %p240 = scmp.eq.s32.totalorder %s29, 1
      %p241 = por %p239, %p240
      %p242 = scmp.ne.s32.totalorder %s233, %s234
      %p243 = scmp.eq.s32.totalorder %s29, 0
      %p244 = por %p242, %p243
      %p245 = scmp.ne.s32.totalorder %s233, %s234
      %p246 = scmp.eq.s32.totalorder %s30, 1
      %p247 = por %p245, %p246
      %p249 = scmp.ne.s32.totalorder %s234, %s248
      %p250 = scmp.eq.s32.totalorder %s30, 0
      %p251 = por %p249, %p250
      %s252 = ssub.s32 %s24, %s31
      %p253 = scmp.eq.s32.totalorder %s252, 0
      %s255 = sadd.s32 %s254, 1
      %s256 = scalar_select %p253, %s254, %s255
      %p259 = pneg %p253
      %p260 = scmp.eq.s32.totalorder %s24, 1
      %p261 = por %p259, %p260
      %p262 = scmp.ne.s32.totalorder %s254, %s257
      %p263 = scmp.eq.s32.totalorder %s24, 0
      %p264 = por %p262, %p263
      %p265 = scmp.ne.s32.totalorder %s254, %s257
      %p266 = scmp.eq.s32.totalorder %s29, 1
      %p267 = por %p265, %p266
      %p268 = scmp.ne.s32.totalorder %s257, %s258
      %p269 = scmp.eq.s32.totalorder %s29, 0
      %p270 = por %p268, %p269
      %p271 = scmp.ne.s32.totalorder %s257, %s258
      %p272 = scmp.eq.s32.totalorder %s30, 1
      %p273 = por %p271, %p272
      %p275 = scmp.ne.s32.totalorder %s258, %s274
      %p276 = scmp.eq.s32.totalorder %s30, 0
      %p277 = por %p275, %p276
      %p278 = scmp.le.s32.totalorder 1, %s24
      %p279 = scmp.lt.s32.totalorder %s24, 3
      %p280 = pnand %p278, %p279
      %p281 = pneg %p280
      // Predicated region
      $region9: #{decoder_forward.3} parent=5 // pred_check
        _
      $region10: #{decoder_forward.3} parent=5 // pred_check_branch
        %283 = sbr.rel (%p280) target = $region12
      $region11: #{decoder_forward.3} parent=5 // pred_region
        %s284 = ssub.s32 %s24, 1
        // Predicated region
        $region13: #{decoder_forward.3} parent=11 // pred_check
          %p285 = pneg %p97
        $region14: #{decoder_forward.3} parent=11 // pred_check_branch
          %287 = sbr.rel (%p285) target = $region16
        $region15: #{decoder_forward.3} parent=11 // pred_region
          %289 = vsyncadd [#allocation5], 0
          %s290 = sshll.u32 %s2, 4
          %s291 = int_to_ptr.hbm [resolvable:$true] %s290
          %s292 = sshll.u32 [#allocation6], 4
          %s293 = int_to_ptr.vmem [resolvable:$true] %s292
          %298 = dma.hbm_to_vmem [thread:$0]  %s291, 512, %s293, [#allocation5], 128, 128, 8
        $region16: #{decoder_forward.3} parent=11 // pred_fallthru
          _
        // Predicated region
        $region17: #{decoder_forward.3} parent=11 // pred_check
          %p299 = pneg %p118
        $region18: #{decoder_forward.3} parent=11 // pred_check_branch
          %301 = sbr.rel (%p299) target = $region20
        $region19: #{decoder_forward.3} parent=11 // pred_region
          _
        $region20: #{decoder_forward.3} parent=11 // pred_fallthru
          _
        // Predicated region
        $region21: #{decoder_forward.3} parent=11 // pred_check
          %p302 = pneg %p139
        $region22: #{decoder_forward.3} parent=11 // pred_check_branch
          %304 = sbr.rel (%p302) target = $region24
        $region23: #{decoder_forward.3} parent=11 // pred_region
          %306 = vsyncadd [#allocation8], 0
          %s307 = sshll.u32 %s4, 4
          %s308 = int_to_ptr.hbm [resolvable:$true] %s307
          %s309 = sshll.u32 [#allocation7], 4
          %s310 = int_to_ptr.vmem [resolvable:$true] %s309
          %315 = dma.hbm_to_vmem [thread:$0]  %s308, 512, %s310, [#allocation8], 128, 128, 8
        $region24: #{decoder_forward.3} parent=11 // pred_fallthru
          _
        // Predicated region
        $region25: #{decoder_forward.3} parent=11 // pred_check
          %p316 = pneg %p160
        $region26: #{decoder_forward.3} parent=11 // pred_check_branch
          %318 = sbr.rel (%p316) target = $region28
        $region27: #{decoder_forward.3} parent=11 // pred_region
          _
        $region28: #{decoder_forward.3} parent=11 // pred_fallthru
          _
        // Predicated region
        $region29: #{decoder_forward.3} parent=11 // pred_check
          %p319 = pneg %p181
        $region30: #{decoder_forward.3} parent=11 // pred_check_branch
          %321 = sbr.rel (%p319) target = $region32
        $region31: #{decoder_forward.3} parent=11 // pred_region
          %323 = vsyncadd [#allocation8], 0
          %s324 = sshll.u32 %s6, 4
          %s325 = int_to_ptr.hbm [resolvable:$true] %s324
          %s326 = sshll.u32 [#allocation9], 4
          %s327 = int_to_ptr.vmem [resolvable:$true] %s326
          %332 = dma.hbm_to_vmem [thread:$0]  %s325, 512, %s327, [#allocation8], 128, 128, 8
        $region32: #{decoder_forward.3} parent=11 // pred_fallthru
          _
        // Predicated region
        $region33: #{decoder_forward.3} parent=11 // pred_check
          %p333 = pneg %p202
        $region34: #{decoder_forward.3} parent=11 // pred_check_branch
          %335 = sbr.rel (%p333) target = $region36
        $region35: #{decoder_forward.3} parent=11 // pred_region
          _
        $region36: #{decoder_forward.3} parent=11 // pred_fallthru
          _
        // Predicated region
        $region37: #{decoder_forward.3} parent=11 // pred_check
          %p336 = pneg %p223
        $region38: #{decoder_forward.3} parent=11 // pred_check_branch
          %338 = sbr.rel (%p336) target = $region40
        $region39: #{decoder_forward.3} parent=11 // pred_region
          %340 = vsyncadd [#allocation11], 0
          %s342 = sshll.u32 %s8, 4
          %s343 = int_to_ptr.hbm [resolvable:$true] %s342
          %s344 = sshll.u32 [#allocation10], 4
          %s345 = int_to_ptr.vmem [resolvable:$true] %s344
          %347 = dma.hbm_to_vmem [thread:$0]  %s343, 16, %s345, [#allocation11]
        $region40: #{decoder_forward.3} parent=11 // pred_fallthru
          _
        // Predicated region
        $region41: #{decoder_forward.3} parent=11 // pred_check
          %p348 = pneg %p244
        $region42: #{decoder_forward.3} parent=11 // pred_check_branch
          %350 = sbr.rel (%p348) target = $region44
        $region43: #{decoder_forward.3} parent=11 // pred_region
          %352 = vsyncadd [#allocation11], 0
          %s354 = sshll.u32 %s9, 4
          %s355 = int_to_ptr.hbm [resolvable:$true] %s354
          %s356 = sshll.u32 [#allocation12], 4
          %s357 = int_to_ptr.vmem [resolvable:$true] %s356
          %359 = dma.hbm_to_vmem [thread:$0]  %s355, 16, %s357, [#allocation11]
        $region44: #{decoder_forward.3} parent=11 // pred_fallthru
          _
      $region12: #{decoder_forward.3} parent=5 // pred_fallthru
        _
      %p360 = scmp.lt.s32.totalorder %s24, 2
      // Predicated region
      $region45: #{decoder_forward.3} parent=5 // pred_check
        %p361 = pneg %p360
      $region46: #{decoder_forward.3} parent=5 // pred_check_branch
        %363 = sbr.rel (%p361) target = $region48
      $region47: #{decoder_forward.3} parent=5 // pred_region
        // Predicated region
        $region49: #{decoder_forward.3} parent=47 // pred_check
          %p364 = pneg %p44
        $region50: #{decoder_forward.3} parent=47 // pred_check_branch
          %366 = sbr.rel (%p364) target = $region52
        $region51: #{decoder_forward.3} parent=47 // pred_region
          %s367 = sand.u32 %s34, 1
          %s368 = scalar_lea.sflag [#allocation3], %s367
          %s369 = sand.u32 %s34, 1
          %s370 = smul.addr %s369, 8
          %s371 = scalar_lea.vmem [#allocation2], %s370
          %373 = vsyncadd %s368, 0
          %s374 = smul.addr %s24, 8
          %s375 = scalar_lea.hbm %s0, %s374
          %s377 = sshll.u32 %s375, 4
          %s378 = int_to_ptr.hbm [resolvable:$true] %s377
          %s379 = sshll.u32 %s371, 4
          %s380 = int_to_ptr.vmem [resolvable:$true] %s379
          %382 = dma.hbm_to_vmem [thread:$0]  %s378, 128, %s380, %s368
        $region52: #{decoder_forward.3} parent=47 // pred_fallthru
          _
        // Predicated region
        $region53: #{decoder_forward.3} parent=47 // pred_check
          %p383 = pneg %p70
        $region54: #{decoder_forward.3} parent=47 // pred_check_branch
          %385 = sbr.rel (%p383) target = $region56
        $region55: #{decoder_forward.3} parent=47 // pred_region
          %s386 = sand.u32 %s24, 1
          %s387 = scalar_lea.sflag [#allocation5], %s386
          %s388 = sand.u32 %s60, 1
          %s389 = smul.addr %s388, 8
          %s390 = scalar_lea.vmem [#allocation4], %s389
          %392 = vsyncadd %s387, 0
          %s393 = smul.addr %s24, 8
          %s394 = scalar_lea.hbm %s1, %s393
          %s396 = sshll.u32 %s394, 4
          %s397 = int_to_ptr.hbm [resolvable:$true] %s396
          %s398 = sshll.u32 %s390, 4
          %s399 = int_to_ptr.vmem [resolvable:$true] %s398
          %401 = dma.hbm_to_vmem [thread:$0]  %s397, 128, %s399, %s387
        $region56: #{decoder_forward.3} parent=47 // pred_fallthru
          _
      $region48: #{decoder_forward.3} parent=5 // pred_fallthru
        _
      %p402 = scmp.le.s32.totalorder 1, %s24
      %p403 = scmp.lt.s32.totalorder %s24, 3
      %p404 = pnand %p402, %p403
      %p405 = pneg %p404
      // Predicated region
      $region57: #{decoder_forward.3} parent=5 // pred_check
        _
      $region58: #{decoder_forward.3} parent=5 // pred_check_branch
        %407 = sbr.rel (%p404) target = $region60
      $region59: #{decoder_forward.3} parent=5 // pred_region
        %s408 = ssub.s32 %s24, 1
        %s409 = sand.u32 %s37, 1
        %s410 = scalar_lea.sflag [#allocation3], %s409
        %s411 = sand.u32 %s37, 1
        %s412 = smul.addr %s411, 8
        %s413 = scalar_lea.vmem [#allocation2], %s412
        // Predicated region
        $region61: #{decoder_forward.3} parent=59 // pred_check
          %p414 = pneg %p50
        $region62: #{decoder_forward.3} parent=59 // pred_check_branch
          %416 = sbr.rel (%p414) target = $region64
        $region63: #{decoder_forward.3} parent=59 // pred_region
          %418 = dma.done %s410, 128
        $region64: #{decoder_forward.3} parent=59 // pred_fallthru
          _
        %s419 = sand.u32 %s29, 1
        %s420 = scalar_lea.sflag [#allocation5], %s419
        %s421 = sand.u32 %s63, 1
        %s422 = smul.addr %s421, 8
        %s423 = scalar_lea.vmem [#allocation4], %s422
        // Predicated region
        $region65: #{decoder_forward.3} parent=59 // pred_check
          %p424 = pneg %p76
        $region66: #{decoder_forward.3} parent=59 // pred_check_branch
          %426 = sbr.rel (%p424) target = $region68
        $region67: #{decoder_forward.3} parent=59 // pred_region
          %428 = dma.done %s420, 128
        $region68: #{decoder_forward.3} parent=59 // pred_fallthru
          _
        // Predicated region
        $region69: #{decoder_forward.3} parent=59 // pred_check
          %p429 = pneg %p97
        $region70: #{decoder_forward.3} parent=59 // pred_check_branch
          %431 = sbr.rel (%p429) target = $region72
        $region71: #{decoder_forward.3} parent=59 // pred_region
          %433 = dma.done [#allocation5], 512
        $region72: #{decoder_forward.3} parent=59 // pred_fallthru
          _
        // Predicated region
        $region73: #{decoder_forward.3} parent=59 // pred_check
          %p434 = pneg %p139
        $region74: #{decoder_forward.3} parent=59 // pred_check_branch
          %436 = sbr.rel (%p434) target = $region76
        $region75: #{decoder_forward.3} parent=59 // pred_region
          %438 = dma.done [#allocation8], 512
        $region76: #{decoder_forward.3} parent=59 // pred_fallthru
          _
        // Predicated region
        $region77: #{decoder_forward.3} parent=59 // pred_check
          %p439 = pneg %p181
        $region78: #{decoder_forward.3} parent=59 // pred_check_branch
          %441 = sbr.rel (%p439) target = $region80
        $region79: #{decoder_forward.3} parent=59 // pred_region
          %443 = dma.done [#allocation8], 512
        $region80: #{decoder_forward.3} parent=59 // pred_fallthru
          _
        // Predicated region
        $region81: #{decoder_forward.3} parent=59 // pred_check
          %p444 = pneg %p223
        $region82: #{decoder_forward.3} parent=59 // pred_check_branch
          %446 = sbr.rel (%p444) target = $region84
        $region83: #{decoder_forward.3} parent=59 // pred_region
          %448 = dma.done [#allocation11], 16
        $region84: #{decoder_forward.3} parent=59 // pred_fallthru
          _
        // Predicated region
        $region85: #{decoder_forward.3} parent=59 // pred_check
          %p449 = pneg %p244
        $region86: #{decoder_forward.3} parent=59 // pred_check_branch
          %451 = sbr.rel (%p449) target = $region88
        $region87: #{decoder_forward.3} parent=59 // pred_region
          %453 = dma.done [#allocation11], 16
        $region88: #{decoder_forward.3} parent=59 // pred_fallthru
          _
        %s454 = sand.u32 %s37, 1
        %s455 = scalar_lea.sflag [#allocation3], %s454
        %s456 = sand.u32 %s37, 1
        %s457 = smul.addr %s456, 8
        %s458 = scalar_lea.vmem [#allocation2], %s457
        %p459 = pneg %p50
        %p460 = pneg %p47
        %s461 = sand.u32 %s29, 1
        %s462 = scalar_lea.sflag [#allocation5], %s461
        %s463 = sand.u32 %s63, 1
        %s464 = smul.addr %s463, 8
        %s465 = scalar_lea.vmem [#allocation4], %s464
        %p466 = pneg %p76
        %p467 = pneg %p73
        %p468 = pneg %p97
        %p469 = pneg %p94
        %p470 = pneg %p118
        %p471 = pneg %p115
        %p472 = pneg %p139
        %p473 = pneg %p136
        %p474 = pneg %p160
        %p475 = pneg %p157
        %p476 = pneg %p181
        %p477 = pneg %p178
        %p478 = pneg %p202
        %p479 = pneg %p199
        %p480 = pneg %p223
        %p481 = pneg %p220
        %p482 = pneg %p244
        %p483 = pneg %p241
        %p484 = pneg %p270
        %p485 = pneg %p267
        %p486 = scmp.lt.s32.totalorder %s29, 1
        %s487 = scalar_select %p486, %s29, 1
        %s488 = smul.addr %s487, 8
        %s489 = scalar_lea.vmem %s10, %s488
        %p490 = scmp.lt.s32.totalorder %s29, 1
        %s491 = scalar_select %p490, %s29, 1
        %s492 = smul.addr %s491, 8
        %s493 = scalar_lea.vmem %s10, %s492
        %v494 = vld [vmem:[%s413] sm:$0xff]
        %v495 = vld [vmem:[%s423] sm:$0xff]
        %v496 = vld [vmem:[#allocation6] sm:$0xff]
        %v497 = vld [vmem:[#allocation6 + $0x8] sm:$0xff]
        %v498 = vld [vmem:[#allocation6 + $0x10] sm:$0xff]
        %v499 = vld [vmem:[#allocation6 + $0x18] sm:$0xff]
        %v500 = vld [vmem:[%s3] sm:$0x1]
        %v502 = vperm.slane %v500, 0
        %vm504 = vcmask 261120
        %v506 = vsel %vm504, %v494, 0
        %508 = vmatpush.msra.mxu0 0.0
        %509 = vmatpush.msra.mxu0 0.0
        %510 = vmatpush.msra.mxu0 0.0
        %511 = vmatpush.msra.mxu0 0.0
        %512 = vmatpush.msra.mxu0 0.0
        %513 = vmatpush.msra.mxu0 0.0
        %514 = vmatpush.msra.mxu0 0.0
        %515 = vmatpush.msra.mxu0 0.0
        %516 = vmatpush.msra.mxu0 0.0
        %517 = vmatpush.msra.mxu0 0.0
        %518 = vmatpush.msra.mxu0 0.0
        %519 = vmatpush.msra.mxu0 0.0
        %520 = vmatpush.msra.mxu0 %v499
        %521 = vmatpush.msra.mxu0 %v498
        %522 = vmatpush.msra.mxu0 %v497
        %523 = vmatpush.msra.mxu0 %v496
        %524 = vmatmul.f32.gmra.mxu0 %v506
        %v525 = vpop.f32.mrf.mxu0
        %v526 = vadd.f32 %v502, %v525
        %527 = vdwg.mxu0
        %v528 = vld [vmem:[#allocation7] sm:$0xff]
        %v529 = vld [vmem:[#allocation7 + $0x8] sm:$0xff]
        %v530 = vld [vmem:[#allocation7 + $0x10] sm:$0xff]
        %v531 = vld [vmem:[#allocation7 + $0x18] sm:$0xff]
        %v532 = vld [vmem:[%s5] sm:$0x1]
        %v534 = vperm.slane %v532, 0
        %v537 = vsel %vm504, %v495, 0
        %539 = vmatpush.msra.mxu0 0.0
        %540 = vmatpush.msra.mxu0 0.0
        %541 = vmatpush.msra.mxu0 0.0
        %542 = vmatpush.msra.mxu0 0.0
        %543 = vmatpush.msra.mxu0 0.0
        %544 = vmatpush.msra.mxu0 0.0
        %545 = vmatpush.msra.mxu0 0.0
        %546 = vmatpush.msra.mxu0 0.0
        %547 = vmatpush.msra.mxu0 0.0
        %548 = vmatpush.msra.mxu0 0.0
        %549 = vmatpush.msra.mxu0 0.0
        %550 = vmatpush.msra.mxu0 0.0
        %551 = vmatpush.msra.mxu0 %v531
        %552 = vmatpush.msra.mxu0 %v530
        %553 = vmatpush.msra.mxu0 %v529
        %554 = vmatpush.msra.mxu0 %v528
        %555 = vmatmul.f32.gmra.mxu0 %v537
        %v556 = vpop.f32.mrf.mxu0
        %v557 = vadd.f32 %v534, %v556
        %558 = vdwg.mxu0
        %vm559 = vcmask 64512
        %v561 = vsel %vm559, %v526, 0
        %v564 = vsel %vm559, %v557, 0
        %566 = vmatpush.xpose.msra.mxu0 0.0
        %567 = vmatpush.xpose.msra.mxu0 0.0
        %568 = vmatpush.xpose.msra.mxu0 0.0
        %569 = vmatpush.xpose.msra.mxu0 0.0
        %570 = vmatpush.xpose.msra.mxu0 0.0
        %571 = vmatpush.xpose.msra.mxu0 0.0
        %572 = vmatpush.xpose.msra.mxu0 0.0
        %573 = vmatpush.xpose.msra.mxu0 0.0
        %574 = vmatpush.xpose.msra.mxu0 0.0
        %575 = vmatpush.xpose.msra.mxu0 0.0
        %576 = vmatpush.xpose.msra.mxu0 0.0
        %577 = vmatpush.xpose.msra.mxu0 0.0
        %578 = vmatpush.xpose.msra.mxu0 0.0
        %579 = vmatpush.xpose.msra.mxu0 0.0
        %580 = vmatpush.xpose.msra.mxu0 0.0
        %581 = vmatpush.xpose.msra.mxu0 %v564
        %582 = vmatmul.f32.gmra.mxu0 %v561
        %v583 = vpop.f32.mrf.mxu0
        %v584 = vadd.f32 0.0, %v583
        %585 = vdwg.mxu0
        %v586 = vmul.f32 %v584, 0.35355338
        %v587 = vsel %vm559, %v586, -inf
        %588 = vmax.xlane.f32.xlu0 %v587
        %v589 = vpop.xlane.xlu0 %588
        %v590 = vsub.f32 %v586, %v589
        %v591 = vmul.f32 %v590, 1.442695
        %v592 = vpow.pop %v591
        %v593 = vsel %vm559, %v592, 0.0
        %594 = vadd.xlane.f32.xlu0 %v593
        %v595 = vpop.xlane.xlu0 %594
        %v596 = vrcp.pop %v595
        %v597 = vmul.f32 %v592, %v596
        %598 = vrot.lane.b32.xlu0 %v557, 96
        %v599 = vpop.permute.xlu0 %598
        %v602 = vsel %vm559, %v597, 0
        %604 = vmatpush.msra.mxu0 0.0
        %605 = vmatpush.msra.mxu0 0.0
        %606 = vmatpush.msra.mxu0 0.0
        %607 = vmatpush.msra.mxu0 0.0
        %608 = vmatpush.msra.mxu0 0.0
        %609 = vmatpush.msra.mxu0 0.0
        %610 = vmatpush.msra.mxu0 0.0
        %611 = vmatpush.msra.mxu0 0.0
        %612 = vmatpush.msra.mxu0 0.0
        %613 = vmatpush.msra.mxu0 0.0
        %614 = vmatpush.msra.mxu0 0.0
        %615 = vmatpush.msra.mxu0 0.0
        %616 = vmatpush.msra.mxu0 0.0
        %617 = vmatpush.msra.mxu0 0.0
        %618 = vmatpush.msra.mxu0 0.0
        %619 = vmatpush.msra.mxu0 %v599
        %620 = vmatmul.f32.gmra.mxu0 %v602
        %v621 = vpop.f32.mrf.mxu0
        %v622 = vadd.f32 0.0, %v621
        %623 = vdwg.mxu0
        %624 = vrot.lane.b32.xlu0 %v526, 120
        %v625 = vpop.permute.xlu0 %624
        %626 = vrot.lane.b32.xlu0 %v557, 120
        %v627 = vpop.permute.xlu0 %626
        %v628 = vsel %vm559, %v625, 0
        %v630 = vsel %vm559, %v627, 0
        %632 = vmatpush.xpose.msra.mxu0 0.0
        %633 = vmatpush.xpose.msra.mxu0 0.0
        %634 = vmatpush.xpose.msra.mxu0 0.0
        %635 = vmatpush.xpose.msra.mxu0 0.0
        %636 = vmatpush.xpose.msra.mxu0 0.0
        %637 = vmatpush.xpose.msra.mxu0 0.0
        %638 = vmatpush.xpose.msra.mxu0 0.0
        %639 = vmatpush.xpose.msra.mxu0 0.0
        %640 = vmatpush.xpose.msra.mxu0 0.0
        %641 = vmatpush.xpose.msra.mxu0 0.0
        %642 = vmatpush.xpose.msra.mxu0 0.0
        %643 = vmatpush.xpose.msra.mxu0 0.0
        %644 = vmatpush.xpose.msra.mxu0 0.0
        %645 = vmatpush.xpose.msra.mxu0 0.0
        %646 = vmatpush.xpose.msra.mxu0 0.0
        %647 = vmatpush.xpose.msra.mxu0 %v630
        %648 = vmatmul.f32.gmra.mxu0 %v628
        %v649 = vpop.f32.mrf.mxu0
        %v650 = vadd.f32 0.0, %v649
        %651 = vdwg.mxu0
        %v652 = vmul.f32 %v650, 0.35355338
        %v653 = vsel %vm559, %v652, -inf
        %654 = vmax.xlane.f32.xlu0 %v653
        %v655 = vpop.xlane.xlu0 %654
        %v656 = vsub.f32 %v652, %v655
        %v657 = vmul.f32 %v656, 1.442695
        %v658 = vpow.pop %v657
        %v659 = vsel %vm559, %v658, 0.0
        %660 = vadd.xlane.f32.xlu0 %v659
        %v661 = vpop.xlane.xlu0 %660
        %v662 = vrcp.pop %v661
        %v663 = vmul.f32 %v658, %v662
        %664 = vrot.lane.b32.xlu0 %v557, 88
        %v665 = vpop.permute.xlu0 %664
        %v668 = vsel %vm559, %v663, 0
        %670 = vmatpush.msra.mxu0 0.0
        %671 = vmatpush.msra.mxu0 0.0
        %672 = vmatpush.msra.mxu0 0.0
        %673 = vmatpush.msra.mxu0 0.0
        %674 = vmatpush.msra.mxu0 0.0
        %675 = vmatpush.msra.mxu0 0.0
        %676 = vmatpush.msra.mxu0 0.0
        %677 = vmatpush.msra.mxu0 0.0
        %678 = vmatpush.msra.mxu0 0.0
        %679 = vmatpush.msra.mxu0 0.0
        %680 = vmatpush.msra.mxu0 0.0
        %681 = vmatpush.msra.mxu0 0.0
        %682 = vmatpush.msra.mxu0 0.0
        %683 = vmatpush.msra.mxu0 0.0
        %684 = vmatpush.msra.mxu0 0.0
        %685 = vmatpush.msra.mxu0 %v665
        %686 = vmatmul.f32.gmra.mxu0 %v668
        %v687 = vpop.f32.mrf.mxu0
        %v688 = vadd.f32 0.0, %v687
        %689 = vdwg.mxu0
        %690 = vrot.lane.b32.xlu0 %v526, 112
        %v691 = vpop.permute.xlu0 %690
        %692 = vrot.lane.b32.xlu0 %v557, 112
        %v693 = vpop.permute.xlu0 %692
        %v694 = vsel %vm559, %v691, 0
        %v696 = vsel %vm559, %v693, 0
        %698 = vmatpush.xpose.msra.mxu0 0.0
        %699 = vmatpush.xpose.msra.mxu0 0.0
        %700 = vmatpush.xpose.msra.mxu0 0.0
        %701 = vmatpush.xpose.msra.mxu0 0.0
        %702 = vmatpush.xpose.msra.mxu0 0.0
        %703 = vmatpush.xpose.msra.mxu0 0.0
        %704 = vmatpush.xpose.msra.mxu0 0.0
        %705 = vmatpush.xpose.msra.mxu0 0.0
        %706 = vmatpush.xpose.msra.mxu0 0.0
        %707 = vmatpush.xpose.msra.mxu0 0.0
        %708 = vmatpush.xpose.msra.mxu0 0.0
        %709 = vmatpush.xpose.msra.mxu0 0.0
        %710 = vmatpush.xpose.msra.mxu0 0.0
        %711 = vmatpush.xpose.msra.mxu0 0.0
        %712 = vmatpush.xpose.msra.mxu0 0.0
        %713 = vmatpush.xpose.msra.mxu0 %v696
        %714 = vmatmul.f32.gmra.mxu0 %v694
        %v715 = vpop.f32.mrf.mxu0
        %v716 = vadd.f32 0.0, %v715
        %717 = vdwg.mxu0
        %v718 = vmul.f32 %v716, 0.35355338
        %v719 = vsel %vm559, %v718, -inf
        %720 = vmax.xlane.f32.xlu0 %v719
        %v721 = vpop.xlane.xlu0 %720
        %v722 = vsub.f32 %v718, %v721
        %v723 = vmul.f32 %v722, 1.442695
        %v724 = vpow.pop %v723
        %v725 = vsel %vm559, %v724, 0.0
        %726 = vadd.xlane.f32.xlu0 %v725
        %v727 = vpop.xlane.xlu0 %726
        %v728 = vrcp.pop %v727
        %v729 = vmul.f32 %v724, %v728
        %730 = vrot.lane.b32.xlu0 %v557, 80
        %v731 = vpop.permute.xlu0 %730
        %v734 = vsel %vm559, %v729, 0
        %736 = vmatpush.msra.mxu0 0.0
        %737 = vmatpush.msra.mxu0 0.0
        %738 = vmatpush.msra.mxu0 0.0
        %739 = vmatpush.msra.mxu0 0.0
        %740 = vmatpush.msra.mxu0 0.0
        %741 = vmatpush.msra.mxu0 0.0
        %742 = vmatpush.msra.mxu0 0.0
        %743 = vmatpush.msra.mxu0 0.0
        %744 = vmatpush.msra.mxu0 0.0
        %745 = vmatpush.msra.mxu0 0.0
        %746 = vmatpush.msra.mxu0 0.0
        %747 = vmatpush.msra.mxu0 0.0
        %748 = vmatpush.msra.mxu0 0.0
        %749 = vmatpush.msra.mxu0 0.0
        %750 = vmatpush.msra.mxu0 0.0
        %751 = vmatpush.msra.mxu0 %v731
        %752 = vmatmul.f32.gmra.mxu0 %v734
        %v753 = vpop.f32.mrf.mxu0
        %v754 = vadd.f32 0.0, %v753
        %755 = vdwg.mxu0
        %756 = vrot.lane.b32.xlu0 %v526, 104
        %v757 = vpop.permute.xlu0 %756
        %758 = vrot.lane.b32.xlu0 %v557, 104
        %v759 = vpop.permute.xlu0 %758
        %v760 = vsel %vm559, %v757, 0
        %v762 = vsel %vm559, %v759, 0
        %764 = vmatpush.xpose.msra.mxu0 0.0
        %765 = vmatpush.xpose.msra.mxu0 0.0
        %766 = vmatpush.xpose.msra.mxu0 0.0
        %767 = vmatpush.xpose.msra.mxu0 0.0
        %768 = vmatpush.xpose.msra.mxu0 0.0
        %769 = vmatpush.xpose.msra.mxu0 0.0
        %770 = vmatpush.xpose.msra.mxu0 0.0
        %771 = vmatpush.xpose.msra.mxu0 0.0
        %772 = vmatpush.xpose.msra.mxu0 0.0
        %773 = vmatpush.xpose.msra.mxu0 0.0
        %774 = vmatpush.xpose.msra.mxu0 0.0
        %775 = vmatpush.xpose.msra.mxu0 0.0
        %776 = vmatpush.xpose.msra.mxu0 0.0
        %777 = vmatpush.xpose.msra.mxu0 0.0
        %778 = vmatpush.xpose.msra.mxu0 0.0
        %779 = vmatpush.xpose.msra.mxu0 %v762
        %780 = vmatmul.f32.gmra.mxu0 %v760
        %v781 = vpop.f32.mrf.mxu0
        %v782 = vadd.f32 0.0, %v781
        %783 = vdwg.mxu0
        %v784 = vmul.f32 %v782, 0.35355338
        %v785 = vsel %vm559, %v784, -inf
        %786 = vmax.xlane.f32.xlu0 %v785
        %v787 = vpop.xlane.xlu0 %786
        %v788 = vsub.f32 %v784, %v787
        %v789 = vmul.f32 %v788, 1.442695
        %v790 = vpow.pop %v789
        %v791 = vsel %vm559, %v790, 0.0
        %792 = vadd.xlane.f32.xlu0 %v791
        %v793 = vpop.xlane.xlu0 %792
        %v794 = vrcp.pop %v793
        %v795 = vmul.f32 %v790, %v794
        %796 = vrot.lane.b32.xlu0 %v557, 72
        %v797 = vpop.permute.xlu0 %796
        %v800 = vsel %vm559, %v795, 0
        %802 = vmatpush.msra.mxu0 0.0
        %803 = vmatpush.msra.mxu0 0.0
        %804 = vmatpush.msra.mxu0 0.0
        %805 = vmatpush.msra.mxu0 0.0
        %806 = vmatpush.msra.mxu0 0.0
        %807 = vmatpush.msra.mxu0 0.0
        %808 = vmatpush.msra.mxu0 0.0
        %809 = vmatpush.msra.mxu0 0.0
        %810 = vmatpush.msra.mxu0 0.0
        %811 = vmatpush.msra.mxu0 0.0
        %812 = vmatpush.msra.mxu0 0.0
        %813 = vmatpush.msra.mxu0 0.0
        %814 = vmatpush.msra.mxu0 0.0
        %815 = vmatpush.msra.mxu0 0.0
        %816 = vmatpush.msra.mxu0 0.0
        %817 = vmatpush.msra.mxu0 %v797
        %818 = vmatmul.f32.gmra.mxu0 %v800
        %v819 = vpop.f32.mrf.mxu0
        %v820 = vadd.f32 0.0, %v819
        %821 = vdwg.mxu0
        %823 = vrot.lane.b32.xlu0 %v688, 8
        %v824 = vpop.permute.xlu0 %823
        %827 = vrot.lane.b32.xlu0 %v754, 16
        %v828 = vpop.permute.xlu0 %827
        %831 = vrot.lane.b32.xlu0 %v820, 24
        %v832 = vpop.permute.xlu0 %831
        %v834 = vsel %vm559, %v622, %v824
        %vm835 = vcmask 130048
        %v836 = vsel %vm835, %v834, %v828
        %vm837 = vcmask 195584
        %v838 = vsel %vm837, %v836, %v832
        %v839 = vld [vmem:[#allocation9] sm:$0xff]
        %v840 = vld [vmem:[#allocation9 + $0x8] sm:$0xff]
        %v841 = vld [vmem:[#allocation9 + $0x10] sm:$0xff]
        %v842 = vld [vmem:[#allocation9 + $0x18] sm:$0xff]
        %v843 = vld [vmem:[%s7] sm:$0x1]
        %v845 = vperm.slane %v843, 0
        %v848 = vsel %vm504, %v838, 0
        %850 = vmatpush.msra.mxu0 0.0
        %851 = vmatpush.msra.mxu0 0.0
        %852 = vmatpush.msra.mxu0 0.0
        %853 = vmatpush.msra.mxu0 0.0
        %854 = vmatpush.msra.mxu0 0.0
        %855 = vmatpush.msra.mxu0 0.0
        %856 = vmatpush.msra.mxu0 0.0
        %857 = vmatpush.msra.mxu0 0.0
        %858 = vmatpush.msra.mxu0 0.0
        %859 = vmatpush.msra.mxu0 0.0
        %860 = vmatpush.msra.mxu0 0.0
        %861 = vmatpush.msra.mxu0 0.0
        %862 = vmatpush.msra.mxu0 %v842
        %863 = vmatpush.msra.mxu0 %v841
        %864 = vmatpush.msra.mxu0 %v840
        %865 = vmatpush.msra.mxu0 %v839
        %866 = vmatmul.f32.gmra.mxu0 %v848
        %v867 = vpop.f32.mrf.mxu0
        %v868 = vadd.f32 %v845, %v867
        %869 = vdwg.mxu0
        %v870 = vadd.f32 %v868, %v494
        %v871 = vsel %vm504, %v870, 0.0
        %872 = vadd.xlane.f32.xlu0 %v871
        %v873 = vpop.xlane.xlu0 %872
        %v874 = vrcp.pop 32.0
        %v875 = vmul.f32 32.0, %v874
        %v876 = vsub.f32 1.0, %v875
        %v877 = vmul.f32 %v874, %v876
        %v878 = vadd.f32 %v874, %v877
        %vm879 = vweird.f32 %v874
        %v880 = vsel %vm879, %v874, %v878
        %v881 = vmul.f32 %v873, %v880
        %v882 = vsub.f32 %v870, %v881
        %v883 = vmul.f32 %v882, %v882
        %v884 = vsel %vm504, %v883, 0.0
        %885 = vadd.xlane.f32.xlu0 %v884
        %v886 = vpop.xlane.xlu0 %885
        %v887 = vmul.f32 %v886, %v880
        %v888 = vadd.f32 %v887, 1e-05
        %v889 = vrsqrt.pop %v888
        %v890 = vmul.f32 %v889, %v888
        %v891 = vmul.f32 %v890, %v889
        %v892 = vmul.f32 0.5, %v891
        %v893 = vsub.f32 1.5, %v892
        %v894 = vmul.f32 %v889, %v893
        %vm895 = vweird.f32 %v888
        %vm896 = vweird.f32 %v889
        %vm897 = vmor %vm895, %vm896
        %v898 = vsel %vm897, %v889, %v894
        %v899 = vmul.f32 %v882, %v898
        %v900 = vld [vmem:[#allocation10] sm:$0x1]
        %v902 = vperm.slane %v900, 0
        %v904 = vmul.f32 %v899, %v902
        %v905 = vld [vmem:[#allocation12] sm:$0x1]
        %v907 = vperm.slane %v905, 0
        %v909 = vadd.f32 %v904, %v907
        %910 = vst.msk [vmem:[%s493] sm:$0xff] %vm504, %v909
        %p911 = scmp.lt.s32.totalorder %s29, 1
        %s912 = scalar_select %p911, %s29, 1
        %s913 = smul.addr %s912, 8
        %s914 = scalar_lea.vmem %s10, %s913
        // Predicated region
        $region89: #{decoder_forward.3} parent=59 // pred_check
          %p915 = pneg %p267
        $region90: #{decoder_forward.3} parent=59 // pred_check_branch
          %917 = sbr.rel (%p915) target = $region92
        $region91: #{decoder_forward.3} parent=59 // pred_region
          _
        $region92: #{decoder_forward.3} parent=59 // pred_fallthru
          _
      $region60: #{decoder_forward.3} parent=5 // pred_fallthru
        _
      %p918 = scmp.le.s32.totalorder 2, %s24
      // Predicated region
      $region93: #{decoder_forward.3} parent=5 // pred_check
        %p919 = pneg %p918
      $region94: #{decoder_forward.3} parent=5 // pred_check_branch
        %921 = sbr.rel (%p919) target = $region96
      $region95: #{decoder_forward.3} parent=5 // pred_region
        %s922 = ssub.s32 %s24, 2
        // Predicated region
        $region97: #{decoder_forward.3} parent=95 // pred_check
          %p923 = pneg %p273
        $region98: #{decoder_forward.3} parent=95 // pred_check_branch
          %925 = sbr.rel (%p923) target = $region100
        $region99: #{decoder_forward.3} parent=95 // pred_region
          %p926 = scmp.lt.s32.totalorder %s30, 1
          %s927 = scalar_select %p926, %s30, 1
          %s928 = smul.addr %s927, 8
          %s929 = scalar_lea.vmem %s10, %s928
        $region100: #{decoder_forward.3} parent=95 // pred_fallthru
          _
      $region96: #{decoder_forward.3} parent=5 // pred_fallthru
        _
    $region6: #{decoder_forward.3} parent=1 // loop_footer
      %s28 = sadd.s32 1, %s24
    $region7: #{decoder_forward.3} parent=1 // loop_footer_branch
      %23 = sbr.rel target = $region3
    $region8: #{decoder_forward.3} parent=1 // loop_exit
      _
    %930 = vsyncpa [#allocation3], 1
    %s931 = scalar_lea.sflag [#allocation3], 1
    %932 = vsyncpa %s931, 1
    %933 = vsyncpa [#allocation5], 1
    %s934 = scalar_lea.sflag [#allocation5], 1
    %935 = vsyncpa %s934, 1
    %936 = vsyncpa [#allocation8], 1
    %937 = vsyncpa [#allocation11], 1

// kernel: decoder_forward.4
$region0: #{decoder_forward.4}
  #allocation0 [shape = 'u32[]', space=smem, size = 0x4, offset = 0x4, fixed_abs, tag = 'smem constant byte address 0x4 - core index']
  #allocation1 [shape = 'u32[72,128]{1,0:T(1,128)}', space=vmem, size = 0x9000, scoped, tag = 'internal scratch']
  %s0 = inlined_call_operand.vmem [shape: f32[2,8,32], index: 0, kind: input, shape index: {}]
  %s1 = inlined_call_operand.hbm [shape: f32[2,8,32], index: 1, kind: input, shape index: {}]
  %s2 = inlined_call_operand.hbm [shape: f32[32,32], index: 2, kind: input, shape index: {}]
  %s3 = inlined_call_operand.vmem [shape: f32[1,32], index: 3, kind: input, shape index: {}]
  %s4 = inlined_call_operand.hbm [shape: f32[32,64], index: 4, kind: input, shape index: {}]
  %s5 = inlined_call_operand.hbm [shape: f32[1,64], index: 5, kind: input, shape index: {}]
  %s6 = inlined_call_operand.hbm [shape: f32[32,32], index: 6, kind: input, shape index: {}]
  %s7 = inlined_call_operand.hbm [shape: f32[1,32], index: 7, kind: input, shape index: {}]
  %s8 = inlined_call_operand.hbm [shape: f32[1,32], index: 8, kind: input, shape index: {}]
  %s9 = inlined_call_operand.hbm [shape: f32[1,32], index: 9, kind: input, shape index: {}]
  %s10 = inlined_call_operand.vmem [shape: f32[2,8,32], index: 10, kind: output, shape index: {}]
  %s11 = sld [smem:[#allocation0]]
  $region105: #{decoder_forward.4} parent=0
    _
  %s13 = ssub.s32 1, %s11
  %s14 = scalar_select 0, %s13, %s11
  $region1: #{decoder_forward.4} parent=0
    #allocation2 [shape = 'u8[8192]{0}', space=vmem, size = 0x2000, scoped, tag = 'input window, operand 1']
    #allocation3 [shape = 's32[2]{0}', space=sflag, size = 0x8, scoped, tag = 'scoped memory for decoder_forward.4']
    #allocation4 [shape = 'u8[16384]{0}', space=vmem, size = 0x4000, scoped, tag = 'input window, operand 2, single buffered']
    #allocation5 [shape = 's32[1]{0}', space=sflag, size = 0x4, scoped, tag = 'scoped memory for decoder_forward.4']
    #allocation6 [shape = 'u8[16384]{0}', space=vmem, size = 0x4000, scoped, tag = 'input window, operand 4, single buffered']
    #allocation7 [shape = 'u8[512]{0}', space=vmem, size = 0x400, scoped, tag = 'input window, operand 5, single buffered']
    #allocation8 [shape = 's32[1]{0}', space=sflag, size = 0x4, scoped, tag = 'scoped memory for decoder_forward.4']
    #allocation9 [shape = 'u8[16384]{0}', space=vmem, size = 0x4000, scoped, tag = 'input window, operand 6, single buffered']
    #allocation10 [shape = 'u8[512]{0}', space=vmem, size = 0x400, scoped, tag = 'input window, operand 7, single buffered']
    #allocation11 [shape = 's32[1]{0}', space=sflag, size = 0x4, scoped, tag = 'scoped memory for decoder_forward.4']
    #allocation12 [shape = 'u8[512]{0}', space=vmem, size = 0x400, scoped, tag = 'input window, operand 8, single buffered']
    #allocation13 [shape = 'u8[512]{0}', space=vmem, size = 0x400, scoped, tag = 'input window, operand 9, single buffered']
    #allocation14 [shape = 's32[1]{0}', space=sflag, size = 0x4, scoped, tag = 'scoped memory for decoder_forward.4']
    %15 = vsyncpa [#allocation3], 0
    %s16 = scalar_lea.sflag [#allocation3], 1
    %17 = vsyncpa %s16, 0
    %18 = vsyncpa [#allocation5], 0
    %19 = vsyncpa [#allocation8], 0
    %20 = vsyncpa [#allocation11], 0
    %21 = vsyncpa [#allocation14], 0
    loop: start=0, step=1, limit=4
    $region2: #{decoder_forward.4} parent=1 // loop_pre_header
      _
    $region3: #{decoder_forward.4} parent=1 // loop_header
      %s23 = sphi 0, %s27
      %p24 = scmp.ge.s32.totalorder %s23, 4
      %s33 = sphi 0, %s35
      %s36 = sphi 0, %s33
      %s37 = sphi 0, %s36
      %s53 = sphi 0, %s37
      %s59 = sphi 0, %s61
      %s62 = sphi 0, %s59
      %s63 = sphi 0, %s62
      %s79 = sphi 0, %s63
      %s83 = sphi 0, %s83
      %s85 = sphi 0, %s83
      %s86 = sphi 0, %s85
      %s100 = sphi 0, %s86
      %s104 = sphi 0, %s104
      %s106 = sphi 0, %s104
      %s107 = sphi 0, %s106
      %s121 = sphi 0, %s107
      %s125 = sphi 0, %s125
      %s127 = sphi 0, %s125
      %s128 = sphi 0, %s127
      %s142 = sphi 0, %s128
      %s146 = sphi 0, %s146
      %s148 = sphi 0, %s146
      %s149 = sphi 0, %s148
      %s163 = sphi 0, %s149
      %s167 = sphi 0, %s167
      %s169 = sphi 0, %s167
      %s170 = sphi 0, %s169
      %s184 = sphi 0, %s170
      %s188 = sphi 0, %s188
      %s190 = sphi 0, %s188
      %s191 = sphi 0, %s190
      %s205 = sphi 0, %s191
      %s209 = sphi 0, %s209
      %s211 = sphi 0, %s209
      %s212 = sphi 0, %s211
      %s226 = sphi 0, %s212
      %s230 = sphi 0, %s230
      %s232 = sphi 0, %s230
      %s233 = sphi 0, %s232
      %s247 = sphi 0, %s233
      %s253 = sphi 0, %s255
      %s256 = sphi 0, %s253
      %s257 = sphi 0, %s256
      %s273 = sphi 0, %s257
    $region4: #{decoder_forward.4} parent=1 // loop_header_branch
      %26 = sbr.rel (%p24) target = $region8
    $region5: #{decoder_forward.4} parent=1 // loop_body
      %s28 = ssub.s32 %s23, 1
      %s29 = ssub.s32 %s23, 2
      %s30 = sadd.s32 %s23, 1
      %s31 = ssub.s32 %s23, %s30
      %p32 = scmp.eq.s32.totalorder %s31, 0
      %s34 = sadd.s32 %s33, 1
      %s35 = scalar_select %p32, %s33, %s34
      %p38 = pneg %p32
      %p39 = scmp.eq.s32.totalorder %s23, 1
      %p40 = por %p38, %p39
      %p41 = scmp.ne.s32.totalorder %s33, %s36
      %p42 = scmp.eq.s32.totalorder %s23, 0
      %p43 = por %p41, %p42
      %p44 = scmp.ne.s32.totalorder %s33, %s36
      %p45 = scmp.eq.s32.totalorder %s28, 1
      %p46 = por %p44, %p45
      %p47 = scmp.ne.s32.totalorder %s36, %s37
      %p48 = scmp.eq.s32.totalorder %s28, 0
      %p49 = por %p47, %p48
      %p50 = scmp.ne.s32.totalorder %s36, %s37
      %p51 = scmp.eq.s32.totalorder %s29, 1
      %p52 = por %p50, %p51
      %p54 = scmp.ne.s32.totalorder %s37, %s53
      %p55 = scmp.eq.s32.totalorder %s29, 0
      %p56 = por %p54, %p55
      %s57 = ssub.s32 %s23, %s30
      %p58 = scmp.eq.s32.totalorder %s57, 0
      %s60 = sadd.s32 %s59, 1
      %s61 = scalar_select %p58, %s59, %s60
      %p64 = pneg %p58
      %p65 = scmp.eq.s32.totalorder %s23, 1
      %p66 = por %p64, %p65
      %p67 = scmp.ne.s32.totalorder %s59, %s62
      %p68 = scmp.eq.s32.totalorder %s23, 0
      %p69 = por %p67, %p68
      %p70 = scmp.ne.s32.totalorder %s59, %s62
      %p71 = scmp.eq.s32.totalorder %s28, 1
      %p72 = por %p70, %p71
      %p73 = scmp.ne.s32.totalorder %s62, %s63
      %p74 = scmp.eq.s32.totalorder %s28, 0
      %p75 = por %p73, %p74
      %p76 = scmp.ne.s32.totalorder %s62, %s63
      %p77 = scmp.eq.s32.totalorder %s29, 1
      %p78 = por %p76, %p77
      %p80 = scmp.ne.s32.totalorder %s63, %s79
      %p81 = scmp.eq.s32.totalorder %s29, 0
      %p82 = por %p80, %p81
      %s84 = sadd.s32 %s83, 1
      %p87 = scmp.eq.s32.totalorder %s23, 1
      %p88 = scmp.ne.s32.totalorder %s83, %s85
      %p89 = scmp.eq.s32.totalorder %s23, 0
      %p90 = por %p88, %p89
      %p91 = scmp.ne.s32.totalorder %s83, %s85
      %p92 = scmp.eq.s32.totalorder %s28, 1
      %p93 = por %p91, %p92
      %p94 = scmp.ne.s32.totalorder %s85, %s86
      %p95 = scmp.eq.s32.totalorder %s28, 0
      %p96 = por %p94, %p95
      %p97 = scmp.ne.s32.totalorder %s85, %s86
      %p98 = scmp.eq.s32.totalorder %s29, 1
      %p99 = por %p97, %p98
      %p101 = scmp.ne.s32.totalorder %s86, %s100
      %p102 = scmp.eq.s32.totalorder %s29, 0
      %p103 = por %p101, %p102
      %s105 = sadd.s32 %s104, 1
      %p108 = scmp.eq.s32.totalorder %s23, 1
      %p109 = scmp.ne.s32.totalorder %s104, %s106
      %p110 = scmp.eq.s32.totalorder %s23, 0
      %p111 = por %p109, %p110
      %p112 = scmp.ne.s32.totalorder %s104, %s106
      %p113 = scmp.eq.s32.totalorder %s28, 1
      %p114 = por %p112, %p113
      %p115 = scmp.ne.s32.totalorder %s106, %s107
      %p116 = scmp.eq.s32.totalorder %s28, 0
      %p117 = por %p115, %p116
      %p118 = scmp.ne.s32.totalorder %s106, %s107
      %p119 = scmp.eq.s32.totalorder %s29, 1
      %p120 = por %p118, %p119
      %p122 = scmp.ne.s32.totalorder %s107, %s121
      %p123 = scmp.eq.s32.totalorder %s29, 0
      %p124 = por %p122, %p123
      %s126 = sadd.s32 %s125, 1
      %p129 = scmp.eq.s32.totalorder %s23, 1
      %p130 = scmp.ne.s32.totalorder %s125, %s127
      %p131 = scmp.eq.s32.totalorder %s23, 0
      %p132 = por %p130, %p131
      %p133 = scmp.ne.s32.totalorder %s125, %s127
      %p134 = scmp.eq.s32.totalorder %s28, 1
      %p135 = por %p133, %p134
      %p136 = scmp.ne.s32.totalorder %s127, %s128
      %p137 = scmp.eq.s32.totalorder %s28, 0
      %p138 = por %p136, %p137
      %p139 = scmp.ne.s32.totalorder %s127, %s128
      %p140 = scmp.eq.s32.totalorder %s29, 1
      %p141 = por %p139, %p140
      %p143 = scmp.ne.s32.totalorder %s128, %s142
      %p144 = scmp.eq.s32.totalorder %s29, 0
      %p145 = por %p143, %p144
      %s147 = sadd.s32 %s146, 1
      %p150 = scmp.eq.s32.totalorder %s23, 1
      %p151 = scmp.ne.s32.totalorder %s146, %s148
      %p152 = scmp.eq.s32.totalorder %s23, 0
      %p153 = por %p151, %p152
      %p154 = scmp.ne.s32.totalorder %s146, %s148
      %p155 = scmp.eq.s32.totalorder %s28, 1
      %p156 = por %p154, %p155
      %p157 = scmp.ne.s32.totalorder %s148, %s149
      %p158 = scmp.eq.s32.totalorder %s28, 0
      %p159 = por %p157, %p158
      %p160 = scmp.ne.s32.totalorder %s148, %s149
      %p161 = scmp.eq.s32.totalorder %s29, 1
      %p162 = por %p160, %p161
      %p164 = scmp.ne.s32.totalorder %s149, %s163
      %p165 = scmp.eq.s32.totalorder %s29, 0
      %p166 = por %p164, %p165
      %s168 = sadd.s32 %s167, 1
      %p171 = scmp.eq.s32.totalorder %s23, 1
      %p172 = scmp.ne.s32.totalorder %s167, %s169
      %p173 = scmp.eq.s32.totalorder %s23, 0
      %p174 = por %p172, %p173
      %p175 = scmp.ne.s32.totalorder %s167, %s169
      %p176 = scmp.eq.s32.totalorder %s28, 1
      %p177 = por %p175, %p176
      %p178 = scmp.ne.s32.totalorder %s169, %s170
      %p179 = scmp.eq.s32.totalorder %s28, 0
      %p180 = por %p178, %p179
      %p181 = scmp.ne.s32.totalorder %s169, %s170
      %p182 = scmp.eq.s32.totalorder %s29, 1
      %p183 = por %p181, %p182
      %p185 = scmp.ne.s32.totalorder %s170, %s184
      %p186 = scmp.eq.s32.totalorder %s29, 0
      %p187 = por %p185, %p186
      %s189 = sadd.s32 %s188, 1
      %p192 = scmp.eq.s32.totalorder %s23, 1
      %p193 = scmp.ne.s32.totalorder %s188, %s190
      %p194 = scmp.eq.s32.totalorder %s23, 0
      %p195 = por %p193, %p194
      %p196 = scmp.ne.s32.totalorder %s188, %s190
      %p197 = scmp.eq.s32.totalorder %s28, 1
      %p198 = por %p196, %p197
      %p199 = scmp.ne.s32.totalorder %s190, %s191
      %p200 = scmp.eq.s32.totalorder %s28, 0
      %p201 = por %p199, %p200
      %p202 = scmp.ne.s32.totalorder %s190, %s191
      %p203 = scmp.eq.s32.totalorder %s29, 1
      %p204 = por %p202, %p203
      %p206 = scmp.ne.s32.totalorder %s191, %s205
      %p207 = scmp.eq.s32.totalorder %s29, 0
      %p208 = por %p206, %p207
      %s210 = sadd.s32 %s209, 1
      %p213 = scmp.eq.s32.totalorder %s23, 1
      %p214 = scmp.ne.s32.totalorder %s209, %s211
      %p215 = scmp.eq.s32.totalorder %s23, 0
      %p216 = por %p214, %p215
      %p217 = scmp.ne.s32.totalorder %s209, %s211
      %p218 = scmp.eq.s32.totalorder %s28, 1
      %p219 = por %p217, %p218
      %p220 = scmp.ne.s32.totalorder %s211, %s212
      %p221 = scmp.eq.s32.totalorder %s28, 0
      %p222 = por %p220, %p221
      %p223 = scmp.ne.s32.totalorder %s211, %s212
      %p224 = scmp.eq.s32.totalorder %s29, 1
      %p225 = por %p223, %p224
      %p227 = scmp.ne.s32.totalorder %s212, %s226
      %p228 = scmp.eq.s32.totalorder %s29, 0
      %p229 = por %p227, %p228
      %s231 = sadd.s32 %s230, 1
      %p234 = scmp.eq.s32.totalorder %s23, 1
      %p235 = scmp.ne.s32.totalorder %s230, %s232
      %p236 = scmp.eq.s32.totalorder %s23, 0
      %p237 = por %p235, %p236
      %p238 = scmp.ne.s32.totalorder %s230, %s232
      %p239 = scmp.eq.s32.totalorder %s28, 1
      %p240 = por %p238, %p239
      %p241 = scmp.ne.s32.totalorder %s232, %s233
      %p242 = scmp.eq.s32.totalorder %s28, 0
      %p243 = por %p241, %p242
      %p244 = scmp.ne.s32.totalorder %s232, %s233
      %p245 = scmp.eq.s32.totalorder %s29, 1
      %p246 = por %p244, %p245
      %p248 = scmp.ne.s32.totalorder %s233, %s247
      %p249 = scmp.eq.s32.totalorder %s29, 0
      %p250 = por %p248, %p249
      %s251 = ssub.s32 %s23, %s30
      %p252 = scmp.eq.s32.totalorder %s251, 0
      %s254 = sadd.s32 %s253, 1
      %s255 = scalar_select %p252, %s253, %s254
      %p258 = pneg %p252
      %p259 = scmp.eq.s32.totalorder %s23, 1
      %p260 = por %p258, %p259
      %p261 = scmp.ne.s32.totalorder %s253, %s256
      %p262 = scmp.eq.s32.totalorder %s23, 0
      %p263 = por %p261, %p262
      %p264 = scmp.ne.s32.totalorder %s253, %s256
      %p265 = scmp.eq.s32.totalorder %s28, 1
      %p266 = por %p264, %p265
      %p267 = scmp.ne.s32.totalorder %s256, %s257
      %p268 = scmp.eq.s32.totalorder %s28, 0
      %p269 = por %p267, %p268
      %p270 = scmp.ne.s32.totalorder %s256, %s257
      %p271 = scmp.eq.s32.totalorder %s29, 1
      %p272 = por %p270, %p271
      %p274 = scmp.ne.s32.totalorder %s257, %s273
      %p275 = scmp.eq.s32.totalorder %s29, 0
      %p276 = por %p274, %p275
      %p277 = scmp.le.s32.totalorder 1, %s23
      %p278 = scmp.lt.s32.totalorder %s23, 3
      %p279 = pnand %p277, %p278
      %p280 = pneg %p279
      // Predicated region
      $region9: #{decoder_forward.4} parent=5 // pred_check
        _
      $region10: #{decoder_forward.4} parent=5 // pred_check_branch
        %282 = sbr.rel (%p279) target = $region12
      $region11: #{decoder_forward.4} parent=5 // pred_region
        %s283 = ssub.s32 %s23, 1
        // Predicated region
        $region13: #{decoder_forward.4} parent=11 // pred_check
          %p284 = pneg %p96
        $region14: #{decoder_forward.4} parent=11 // pred_check_branch
          %286 = sbr.rel (%p284) target = $region16
        $region15: #{decoder_forward.4} parent=11 // pred_region
          %288 = vsyncadd [#allocation5], 0
          %s289 = sshll.u32 %s2, 4
          %s290 = int_to_ptr.hbm [resolvable:$true] %s289
          %s291 = sshll.u32 [#allocation4], 4
          %s292 = int_to_ptr.vmem [resolvable:$true] %s291
          %297 = dma.hbm_to_vmem [thread:$0]  %s290, 512, %s292, [#allocation5], 128, 128, 8
        $region16: #{decoder_forward.4} parent=11 // pred_fallthru
          _
        // Predicated region
        $region17: #{decoder_forward.4} parent=11 // pred_check
          %p298 = pneg %p117
        $region18: #{decoder_forward.4} parent=11 // pred_check_branch
          %300 = sbr.rel (%p298) target = $region20
        $region19: #{decoder_forward.4} parent=11 // pred_region
          _
        $region20: #{decoder_forward.4} parent=11 // pred_fallthru
          _
        // Predicated region
        $region21: #{decoder_forward.4} parent=11 // pred_check
          %p301 = pneg %p138
        $region22: #{decoder_forward.4} parent=11 // pred_check_branch
          %303 = sbr.rel (%p301) target = $region24
        $region23: #{decoder_forward.4} parent=11 // pred_region
          %305 = vsyncadd [#allocation5], 0
          %s306 = sshll.u32 %s4, 4
          %s307 = int_to_ptr.hbm [resolvable:$true] %s306
          %s308 = sshll.u32 [#allocation6], 4
          %s309 = int_to_ptr.vmem [resolvable:$true] %s308
          %314 = dma.hbm_to_vmem [thread:$0]  %s307, 512, %s309, [#allocation5], 128, 128, 8
        $region24: #{decoder_forward.4} parent=11 // pred_fallthru
          _
        // Predicated region
        $region25: #{decoder_forward.4} parent=11 // pred_check
          %p315 = pneg %p159
        $region26: #{decoder_forward.4} parent=11 // pred_check_branch
          %317 = sbr.rel (%p315) target = $region28
        $region27: #{decoder_forward.4} parent=11 // pred_region
          %319 = vsyncadd [#allocation8], 0
          %s321 = sshll.u32 %s5, 4
          %s322 = int_to_ptr.hbm [resolvable:$true] %s321
          %s323 = sshll.u32 [#allocation7], 4
          %s324 = int_to_ptr.vmem [resolvable:$true] %s323
          %326 = dma.hbm_to_vmem [thread:$0]  %s322, 16, %s324, [#allocation8]
        $region28: #{decoder_forward.4} parent=11 // pred_fallthru
          _
        // Predicated region
        $region29: #{decoder_forward.4} parent=11 // pred_check
          %p327 = pneg %p180
        $region30: #{decoder_forward.4} parent=11 // pred_check_branch
          %329 = sbr.rel (%p327) target = $region32
        $region31: #{decoder_forward.4} parent=11 // pred_region
          %331 = vsyncadd [#allocation8], 0
          %s332 = sshll.u32 %s6, 4
          %s333 = int_to_ptr.hbm [resolvable:$true] %s332
          %s334 = sshll.u32 [#allocation9], 4
          %s335 = int_to_ptr.vmem [resolvable:$true] %s334
          %340 = dma.hbm_to_vmem [thread:$0]  %s333, 512, %s335, [#allocation8], 128, 128, 8
        $region32: #{decoder_forward.4} parent=11 // pred_fallthru
          _
        // Predicated region
        $region33: #{decoder_forward.4} parent=11 // pred_check
          %p341 = pneg %p201
        $region34: #{decoder_forward.4} parent=11 // pred_check_branch
          %343 = sbr.rel (%p341) target = $region36
        $region35: #{decoder_forward.4} parent=11 // pred_region
          %345 = vsyncadd [#allocation11], 0
          %s347 = sshll.u32 %s7, 4
          %s348 = int_to_ptr.hbm [resolvable:$true] %s347
          %s349 = sshll.u32 [#allocation10], 4
          %s350 = int_to_ptr.vmem [resolvable:$true] %s349
          %352 = dma.hbm_to_vmem [thread:$0]  %s348, 16, %s350, [#allocation11]
        $region36: #{decoder_forward.4} parent=11 // pred_fallthru
          _
        // Predicated region
        $region37: #{decoder_forward.4} parent=11 // pred_check
          %p353 = pneg %p222
        $region38: #{decoder_forward.4} parent=11 // pred_check_branch
          %355 = sbr.rel (%p353) target = $region40
        $region39: #{decoder_forward.4} parent=11 // pred_region
          %357 = vsyncadd [#allocation11], 0
          %s359 = sshll.u32 %s8, 4
          %s360 = int_to_ptr.hbm [resolvable:$true] %s359
          %s361 = sshll.u32 [#allocation12], 4
          %s362 = int_to_ptr.vmem [resolvable:$true] %s361
          %364 = dma.hbm_to_vmem [thread:$0]  %s360, 16, %s362, [#allocation11]
        $region40: #{decoder_forward.4} parent=11 // pred_fallthru
          _
        // Predicated region
        $region41: #{decoder_forward.4} parent=11 // pred_check
          %p365 = pneg %p243
        $region42: #{decoder_forward.4} parent=11 // pred_check_branch
          %367 = sbr.rel (%p365) target = $region44
        $region43: #{decoder_forward.4} parent=11 // pred_region
          %369 = vsyncadd [#allocation14], 0
          %s371 = sshll.u32 %s9, 4
          %s372 = int_to_ptr.hbm [resolvable:$true] %s371
          %s373 = sshll.u32 [#allocation13], 4
          %s374 = int_to_ptr.vmem [resolvable:$true] %s373
          %376 = dma.hbm_to_vmem [thread:$0]  %s372, 16, %s374, [#allocation14]
        $region44: #{decoder_forward.4} parent=11 // pred_fallthru
          _
      $region12: #{decoder_forward.4} parent=5 // pred_fallthru
        _
      %p377 = scmp.lt.s32.totalorder %s23, 2
      // Predicated region
      $region45: #{decoder_forward.4} parent=5 // pred_check
        %p378 = pneg %p377
      $region46: #{decoder_forward.4} parent=5 // pred_check_branch
        %380 = sbr.rel (%p378) target = $region48
      $region47: #{decoder_forward.4} parent=5 // pred_region
        // Predicated region
        $region49: #{decoder_forward.4} parent=47 // pred_check
          %p381 = pneg %p43
        $region50: #{decoder_forward.4} parent=47 // pred_check_branch
          %383 = sbr.rel (%p381) target = $region52
        $region51: #{decoder_forward.4} parent=47 // pred_region
          %p384 = scmp.lt.s32.totalorder %s23, 1
          %s385 = scalar_select %p384, %s23, 1
          %s386 = smul.addr %s385, 8
          %s387 = scalar_lea.vmem %s0, %s386
        $region52: #{decoder_forward.4} parent=47 // pred_fallthru
          _
        // Predicated region
        $region53: #{decoder_forward.4} parent=47 // pred_check
          %p388 = pneg %p69
        $region54: #{decoder_forward.4} parent=47 // pred_check_branch
          %390 = sbr.rel (%p388) target = $region56
        $region55: #{decoder_forward.4} parent=47 // pred_region
          %s391 = sand.u32 %s59, 1
          %s392 = scalar_lea.sflag [#allocation3], %s391
          %s393 = sand.u32 %s59, 1
          %s394 = smul.addr %s393, 8
          %s395 = scalar_lea.vmem [#allocation2], %s394
          %397 = vsyncadd %s392, 0
          %s398 = smul.addr %s23, 8
          %s399 = scalar_lea.hbm %s1, %s398
          %s401 = sshll.u32 %s399, 4
          %s402 = int_to_ptr.hbm [resolvable:$true] %s401
          %s403 = sshll.u32 %s395, 4
          %s404 = int_to_ptr.vmem [resolvable:$true] %s403
          %406 = dma.hbm_to_vmem [thread:$0]  %s402, 128, %s404, %s392
        $region56: #{decoder_forward.4} parent=47 // pred_fallthru
          _
      $region48: #{decoder_forward.4} parent=5 // pred_fallthru
        _
      %p407 = scmp.le.s32.totalorder 1, %s23
      %p408 = scmp.lt.s32.totalorder %s23, 3
      %p409 = pnand %p407, %p408
      %p410 = pneg %p409
      // Predicated region
      $region57: #{decoder_forward.4} parent=5 // pred_check
        _
      $region58: #{decoder_forward.4} parent=5 // pred_check_branch
        %412 = sbr.rel (%p409) target = $region60
      $region59: #{decoder_forward.4} parent=5 // pred_region
        %s413 = ssub.s32 %s23, 1
        %s414 = sand.u32 %s62, 1
        %s415 = scalar_lea.sflag [#allocation3], %s414
        %s416 = sand.u32 %s62, 1
        %s417 = smul.addr %s416, 8
        %s418 = scalar_lea.vmem [#allocation2], %s417
        // Predicated region
        $region61: #{decoder_forward.4} parent=59 // pred_check
          %p419 = pneg %p75
        $region62: #{decoder_forward.4} parent=59 // pred_check_branch
          %421 = sbr.rel (%p419) target = $region64
        $region63: #{decoder_forward.4} parent=59 // pred_region
          %423 = dma.done %s415, 128
        $region64: #{decoder_forward.4} parent=59 // pred_fallthru
          _
        // Predicated region
        $region65: #{decoder_forward.4} parent=59 // pred_check
          %p424 = pneg %p96
        $region66: #{decoder_forward.4} parent=59 // pred_check_branch
          %426 = sbr.rel (%p424) target = $region68
        $region67: #{decoder_forward.4} parent=59 // pred_region
          %428 = dma.done [#allocation5], 512
        $region68: #{decoder_forward.4} parent=59 // pred_fallthru
          _
        // Predicated region
        $region69: #{decoder_forward.4} parent=59 // pred_check
          %p429 = pneg %p138
        $region70: #{decoder_forward.4} parent=59 // pred_check_branch
          %431 = sbr.rel (%p429) target = $region72
        $region71: #{decoder_forward.4} parent=59 // pred_region
          %433 = dma.done [#allocation5], 512
        $region72: #{decoder_forward.4} parent=59 // pred_fallthru
          _
        // Predicated region
        $region73: #{decoder_forward.4} parent=59 // pred_check
          %p434 = pneg %p159
        $region74: #{decoder_forward.4} parent=59 // pred_check_branch
          %436 = sbr.rel (%p434) target = $region76
        $region75: #{decoder_forward.4} parent=59 // pred_region
          %438 = dma.done [#allocation8], 16
        $region76: #{decoder_forward.4} parent=59 // pred_fallthru
          _
        // Predicated region
        $region77: #{decoder_forward.4} parent=59 // pred_check
          %p439 = pneg %p180
        $region78: #{decoder_forward.4} parent=59 // pred_check_branch
          %441 = sbr.rel (%p439) target = $region80
        $region79: #{decoder_forward.4} parent=59 // pred_region
          %443 = dma.done [#allocation8], 512
        $region80: #{decoder_forward.4} parent=59 // pred_fallthru
          _
        // Predicated region
        $region81: #{decoder_forward.4} parent=59 // pred_check
          %p444 = pneg %p201
        $region82: #{decoder_forward.4} parent=59 // pred_check_branch
          %446 = sbr.rel (%p444) target = $region84
        $region83: #{decoder_forward.4} parent=59 // pred_region
          %448 = dma.done [#allocation11], 16
        $region84: #{decoder_forward.4} parent=59 // pred_fallthru
          _
        // Predicated region
        $region85: #{decoder_forward.4} parent=59 // pred_check
          %p449 = pneg %p222
        $region86: #{decoder_forward.4} parent=59 // pred_check_branch
          %451 = sbr.rel (%p449) target = $region88
        $region87: #{decoder_forward.4} parent=59 // pred_region
          %453 = dma.done [#allocation11], 16
        $region88: #{decoder_forward.4} parent=59 // pred_fallthru
          _
        // Predicated region
        $region89: #{decoder_forward.4} parent=59 // pred_check
          %p454 = pneg %p243
        $region90: #{decoder_forward.4} parent=59 // pred_check_branch
          %456 = sbr.rel (%p454) target = $region92
        $region91: #{decoder_forward.4} parent=59 // pred_region
          %458 = dma.done [#allocation14], 16
        $region92: #{decoder_forward.4} parent=59 // pred_fallthru
          _
        %p459 = scmp.lt.s32.totalorder %s28, 1
        %s460 = scalar_select %p459, %s28, 1
        %s461 = smul.addr %s460, 8
        %s462 = scalar_lea.vmem %s0, %s461
        %p463 = pneg %p49
        %p464 = pneg %p46
        %s465 = sand.u32 %s62, 1
        %s466 = scalar_lea.sflag [#allocation3], %s465
        %s467 = sand.u32 %s62, 1
        %s468 = smul.addr %s467, 8
        %s469 = scalar_lea.vmem [#allocation2], %s468
        %p470 = pneg %p75
        %p471 = pneg %p72
        %p472 = pneg %p96
        %p473 = pneg %p93
        %p474 = pneg %p117
        %p475 = pneg %p114
        %p476 = pneg %p138
        %p477 = pneg %p135
        %p478 = pneg %p159
        %p479 = pneg %p156
        %p480 = pneg %p180
        %p481 = pneg %p177
        %p482 = pneg %p201
        %p483 = pneg %p198
        %p484 = pneg %p222
        %p485 = pneg %p219
        %p486 = pneg %p243
        %p487 = pneg %p240
        %p488 = pneg %p269
        %p489 = pneg %p266
        %p490 = scmp.lt.s32.totalorder %s28, 1
        %s491 = scalar_select %p490, %s28, 1
        %s492 = smul.addr %s491, 8
        %s493 = scalar_lea.vmem %s10, %s492
        %p494 = scmp.lt.s32.totalorder %s28, 1
        %s495 = scalar_select %p494, %s28, 1
        %s496 = smul.addr %s495, 8
        %s497 = scalar_lea.vmem %s0, %s496
        %p498 = scmp.lt.s32.totalorder %s28, 1
        %s499 = scalar_select %p498, %s28, 1
        %s500 = smul.addr %s499, 8
        %s501 = scalar_lea.vmem %s10, %s500
        %v502 = vld [vmem:[%s497] sm:$0xff]
        %v503 = vld [vmem:[%s418] sm:$0xff]
        %v504 = vld [vmem:[#allocation4] sm:$0xff]
        %v505 = vld [vmem:[#allocation4 + $0x8] sm:$0xff]
        %v506 = vld [vmem:[#allocation4 + $0x10] sm:$0xff]
        %v507 = vld [vmem:[#allocation4 + $0x18] sm:$0xff]
        %v508 = vld [vmem:[%s3] sm:$0x1]
        %v510 = vperm.slane %v508, 0
        %vm512 = vcmask 261120
        %v514 = vsel %vm512, %v502, 0
        %516 = vmatpush.msra.mxu0 0.0
        %517 = vmatpush.msra.mxu0 0.0
        %518 = vmatpush.msra.mxu0 0.0
        %519 = vmatpush.msra.mxu0 0.0
        %520 = vmatpush.msra.mxu0 0.0
        %521 = vmatpush.msra.mxu0 0.0
        %522 = vmatpush.msra.mxu0 0.0
        %523 = vmatpush.msra.mxu0 0.0
        %524 = vmatpush.msra.mxu0 0.0
        %525 = vmatpush.msra.mxu0 0.0
        %526 = vmatpush.msra.mxu0 0.0
        %527 = vmatpush.msra.mxu0 0.0
        %528 = vmatpush.msra.mxu0 %v507
        %529 = vmatpush.msra.mxu0 %v506
        %530 = vmatpush.msra.mxu0 %v505
        %531 = vmatpush.msra.mxu0 %v504
        %532 = vmatmul.f32.gmra.mxu0 %v514
        %v533 = vpop.f32.mrf.mxu0
        %v534 = vadd.f32 %v510, %v533
        %535 = vdwg.mxu0
        %v536 = vld [vmem:[#allocation6] sm:$0xff]
        %v537 = vld [vmem:[#allocation6 + $0x8] sm:$0xff]
        %v538 = vld [vmem:[#allocation6 + $0x10] sm:$0xff]
        %v539 = vld [vmem:[#allocation6 + $0x18] sm:$0xff]
        %v540 = vld [vmem:[#allocation7] sm:$0x1]
        %v542 = vperm.slane %v540, 0
        %v545 = vsel %vm512, %v503, 0
        %547 = vmatpush.msra.mxu0 0.0
        %548 = vmatpush.msra.mxu0 0.0
        %549 = vmatpush.msra.mxu0 0.0
        %550 = vmatpush.msra.mxu0 0.0
        %551 = vmatpush.msra.mxu0 0.0
        %552 = vmatpush.msra.mxu0 0.0
        %553 = vmatpush.msra.mxu0 0.0
        %554 = vmatpush.msra.mxu0 0.0
        %555 = vmatpush.msra.mxu0 0.0
        %556 = vmatpush.msra.mxu0 0.0
        %557 = vmatpush.msra.mxu0 0.0
        %558 = vmatpush.msra.mxu0 0.0
        %559 = vmatpush.msra.mxu0 %v539
        %560 = vmatpush.msra.mxu0 %v538
        %561 = vmatpush.msra.mxu0 %v537
        %562 = vmatpush.msra.mxu0 %v536
        %563 = vmatmul.f32.gmra.mxu0 %v545
        %v564 = vpop.f32.mrf.mxu0
        %v565 = vadd.f32 %v542, %v564
        %566 = vdwg.mxu0
        %vm567 = vcmask 64512
        %v569 = vsel %vm567, %v534, 0
        %v572 = vsel %vm567, %v565, 0
        %574 = vmatpush.xpose.msra.mxu0 0.0
        %575 = vmatpush.xpose.msra.mxu0 0.0
        %576 = vmatpush.xpose.msra.mxu0 0.0
        %577 = vmatpush.xpose.msra.mxu0 0.0
        %578 = vmatpush.xpose.msra.mxu0 0.0
        %579 = vmatpush.xpose.msra.mxu0 0.0
        %580 = vmatpush.xpose.msra.mxu0 0.0
        %581 = vmatpush.xpose.msra.mxu0 0.0
        %582 = vmatpush.xpose.msra.mxu0 0.0
        %583 = vmatpush.xpose.msra.mxu0 0.0
        %584 = vmatpush.xpose.msra.mxu0 0.0
        %585 = vmatpush.xpose.msra.mxu0 0.0
        %586 = vmatpush.xpose.msra.mxu0 0.0
        %587 = vmatpush.xpose.msra.mxu0 0.0
        %588 = vmatpush.xpose.msra.mxu0 0.0
        %589 = vmatpush.xpose.msra.mxu0 %v572
        %590 = vmatmul.f32.gmra.mxu0 %v569
        %v591 = vpop.f32.mrf.mxu0
        %v592 = vadd.f32 0.0, %v591
        %593 = vdwg.mxu0
        %v594 = vmul.f32 %v592, 0.35355338
        %v595 = vsel %vm567, %v594, -inf
        %596 = vmax.xlane.f32.xlu0 %v595
        %v597 = vpop.xlane.xlu0 %596
        %v598 = vsub.f32 %v594, %v597
        %v599 = vmul.f32 %v598, 1.442695
        %v600 = vpow.pop %v599
        %v601 = vsel %vm567, %v600, 0.0
        %602 = vadd.xlane.f32.xlu0 %v601
        %v603 = vpop.xlane.xlu0 %602
        %v604 = vrcp.pop %v603
        %v605 = vmul.f32 %v600, %v604
        %606 = vrot.lane.b32.xlu0 %v565, 96
        %v607 = vpop.permute.xlu0 %606
        %v610 = vsel %vm567, %v605, 0
        %612 = vmatpush.msra.mxu0 0.0
        %613 = vmatpush.msra.mxu0 0.0
        %614 = vmatpush.msra.mxu0 0.0
        %615 = vmatpush.msra.mxu0 0.0
        %616 = vmatpush.msra.mxu0 0.0
        %617 = vmatpush.msra.mxu0 0.0
        %618 = vmatpush.msra.mxu0 0.0
        %619 = vmatpush.msra.mxu0 0.0
        %620 = vmatpush.msra.mxu0 0.0
        %621 = vmatpush.msra.mxu0 0.0
        %622 = vmatpush.msra.mxu0 0.0
        %623 = vmatpush.msra.mxu0 0.0
        %624 = vmatpush.msra.mxu0 0.0
        %625 = vmatpush.msra.mxu0 0.0
        %626 = vmatpush.msra.mxu0 0.0
        %627 = vmatpush.msra.mxu0 %v607
        %628 = vmatmul.f32.gmra.mxu0 %v610
        %v629 = vpop.f32.mrf.mxu0
        %v630 = vadd.f32 0.0, %v629
        %631 = vdwg.mxu0
        %632 = vrot.lane.b32.xlu0 %v534, 120
        %v633 = vpop.permute.xlu0 %632
        %634 = vrot.lane.b32.xlu0 %v565, 120
        %v635 = vpop.permute.xlu0 %634
        %v636 = vsel %vm567, %v633, 0
        %v638 = vsel %vm567, %v635, 0
        %640 = vmatpush.xpose.msra.mxu0 0.0
        %641 = vmatpush.xpose.msra.mxu0 0.0
        %642 = vmatpush.xpose.msra.mxu0 0.0
        %643 = vmatpush.xpose.msra.mxu0 0.0
        %644 = vmatpush.xpose.msra.mxu0 0.0
        %645 = vmatpush.xpose.msra.mxu0 0.0
        %646 = vmatpush.xpose.msra.mxu0 0.0
        %647 = vmatpush.xpose.msra.mxu0 0.0
        %648 = vmatpush.xpose.msra.mxu0 0.0
        %649 = vmatpush.xpose.msra.mxu0 0.0
        %650 = vmatpush.xpose.msra.mxu0 0.0
        %651 = vmatpush.xpose.msra.mxu0 0.0
        %652 = vmatpush.xpose.msra.mxu0 0.0
        %653 = vmatpush.xpose.msra.mxu0 0.0
        %654 = vmatpush.xpose.msra.mxu0 0.0
        %655 = vmatpush.xpose.msra.mxu0 %v638
        %656 = vmatmul.f32.gmra.mxu0 %v636
        %v657 = vpop.f32.mrf.mxu0
        %v658 = vadd.f32 0.0, %v657
        %659 = vdwg.mxu0
        %v660 = vmul.f32 %v658, 0.35355338
        %v661 = vsel %vm567, %v660, -inf
        %662 = vmax.xlane.f32.xlu0 %v661
        %v663 = vpop.xlane.xlu0 %662
        %v664 = vsub.f32 %v660, %v663
        %v665 = vmul.f32 %v664, 1.442695
        %v666 = vpow.pop %v665
        %v667 = vsel %vm567, %v666, 0.0
        %668 = vadd.xlane.f32.xlu0 %v667
        %v669 = vpop.xlane.xlu0 %668
        %v670 = vrcp.pop %v669
        %v671 = vmul.f32 %v666, %v670
        %672 = vrot.lane.b32.xlu0 %v565, 88
        %v673 = vpop.permute.xlu0 %672
        %v676 = vsel %vm567, %v671, 0
        %678 = vmatpush.msra.mxu0 0.0
        %679 = vmatpush.msra.mxu0 0.0
        %680 = vmatpush.msra.mxu0 0.0
        %681 = vmatpush.msra.mxu0 0.0
        %682 = vmatpush.msra.mxu0 0.0
        %683 = vmatpush.msra.mxu0 0.0
        %684 = vmatpush.msra.mxu0 0.0
        %685 = vmatpush.msra.mxu0 0.0
        %686 = vmatpush.msra.mxu0 0.0
        %687 = vmatpush.msra.mxu0 0.0
        %688 = vmatpush.msra.mxu0 0.0
        %689 = vmatpush.msra.mxu0 0.0
        %690 = vmatpush.msra.mxu0 0.0
        %691 = vmatpush.msra.mxu0 0.0
        %692 = vmatpush.msra.mxu0 0.0
        %693 = vmatpush.msra.mxu0 %v673
        %694 = vmatmul.f32.gmra.mxu0 %v676
        %v695 = vpop.f32.mrf.mxu0
        %v696 = vadd.f32 0.0, %v695
        %697 = vdwg.mxu0
        %698 = vrot.lane.b32.xlu0 %v534, 112
        %v699 = vpop.permute.xlu0 %698
        %700 = vrot.lane.b32.xlu0 %v565, 112
        %v701 = vpop.permute.xlu0 %700
        %v702 = vsel %vm567, %v699, 0
        %v704 = vsel %vm567, %v701, 0
        %706 = vmatpush.xpose.msra.mxu0 0.0
        %707 = vmatpush.xpose.msra.mxu0 0.0
        %708 = vmatpush.xpose.msra.mxu0 0.0
        %709 = vmatpush.xpose.msra.mxu0 0.0
        %710 = vmatpush.xpose.msra.mxu0 0.0
        %711 = vmatpush.xpose.msra.mxu0 0.0
        %712 = vmatpush.xpose.msra.mxu0 0.0
        %713 = vmatpush.xpose.msra.mxu0 0.0
        %714 = vmatpush.xpose.msra.mxu0 0.0
        %715 = vmatpush.xpose.msra.mxu0 0.0
        %716 = vmatpush.xpose.msra.mxu0 0.0
        %717 = vmatpush.xpose.msra.mxu0 0.0
        %718 = vmatpush.xpose.msra.mxu0 0.0
        %719 = vmatpush.xpose.msra.mxu0 0.0
        %720 = vmatpush.xpose.msra.mxu0 0.0
        %721 = vmatpush.xpose.msra.mxu0 %v704
        %722 = vmatmul.f32.gmra.mxu0 %v702
        %v723 = vpop.f32.mrf.mxu0
        %v724 = vadd.f32 0.0, %v723
        %725 = vdwg.mxu0
        %v726 = vmul.f32 %v724, 0.35355338
        %v727 = vsel %vm567, %v726, -inf
        %728 = vmax.xlane.f32.xlu0 %v727
        %v729 = vpop.xlane.xlu0 %728
        %v730 = vsub.f32 %v726, %v729
        %v731 = vmul.f32 %v730, 1.442695
        %v732 = vpow.pop %v731
        %v733 = vsel %vm567, %v732, 0.0
        %734 = vadd.xlane.f32.xlu0 %v733
        %v735 = vpop.xlane.xlu0 %734
        %v736 = vrcp.pop %v735
        %v737 = vmul.f32 %v732, %v736
        %738 = vrot.lane.b32.xlu0 %v565, 80
        %v739 = vpop.permute.xlu0 %738
        %v742 = vsel %vm567, %v737, 0
        %744 = vmatpush.msra.mxu0 0.0
        %745 = vmatpush.msra.mxu0 0.0
        %746 = vmatpush.msra.mxu0 0.0
        %747 = vmatpush.msra.mxu0 0.0
        %748 = vmatpush.msra.mxu0 0.0
        %749 = vmatpush.msra.mxu0 0.0
        %750 = vmatpush.msra.mxu0 0.0
        %751 = vmatpush.msra.mxu0 0.0
        %752 = vmatpush.msra.mxu0 0.0
        %753 = vmatpush.msra.mxu0 0.0
        %754 = vmatpush.msra.mxu0 0.0
        %755 = vmatpush.msra.mxu0 0.0
        %756 = vmatpush.msra.mxu0 0.0
        %757 = vmatpush.msra.mxu0 0.0
        %758 = vmatpush.msra.mxu0 0.0
        %759 = vmatpush.msra.mxu0 %v739
        %760 = vmatmul.f32.gmra.mxu0 %v742
        %v761 = vpop.f32.mrf.mxu0
        %v762 = vadd.f32 0.0, %v761
        %763 = vdwg.mxu0
        %764 = vrot.lane.b32.xlu0 %v534, 104
        %v765 = vpop.permute.xlu0 %764
        %766 = vrot.lane.b32.xlu0 %v565, 104
        %v767 = vpop.permute.xlu0 %766
        %v768 = vsel %vm567, %v765, 0
        %v770 = vsel %vm567, %v767, 0
        %772 = vmatpush.xpose.msra.mxu0 0.0
        %773 = vmatpush.xpose.msra.mxu0 0.0
        %774 = vmatpush.xpose.msra.mxu0 0.0
        %775 = vmatpush.xpose.msra.mxu0 0.0
        %776 = vmatpush.xpose.msra.mxu0 0.0
        %777 = vmatpush.xpose.msra.mxu0 0.0
        %778 = vmatpush.xpose.msra.mxu0 0.0
        %779 = vmatpush.xpose.msra.mxu0 0.0
        %780 = vmatpush.xpose.msra.mxu0 0.0
        %781 = vmatpush.xpose.msra.mxu0 0.0
        %782 = vmatpush.xpose.msra.mxu0 0.0
        %783 = vmatpush.xpose.msra.mxu0 0.0
        %784 = vmatpush.xpose.msra.mxu0 0.0
        %785 = vmatpush.xpose.msra.mxu0 0.0
        %786 = vmatpush.xpose.msra.mxu0 0.0
        %787 = vmatpush.xpose.msra.mxu0 %v770
        %788 = vmatmul.f32.gmra.mxu0 %v768
        %v789 = vpop.f32.mrf.mxu0
        %v790 = vadd.f32 0.0, %v789
        %791 = vdwg.mxu0
        %v792 = vmul.f32 %v790, 0.35355338
        %v793 = vsel %vm567, %v792, -inf
        %794 = vmax.xlane.f32.xlu0 %v793
        %v795 = vpop.xlane.xlu0 %794
        %v796 = vsub.f32 %v792, %v795
        %v797 = vmul.f32 %v796, 1.442695
        %v798 = vpow.pop %v797
        %v799 = vsel %vm567, %v798, 0.0
        %800 = vadd.xlane.f32.xlu0 %v799
        %v801 = vpop.xlane.xlu0 %800
        %v802 = vrcp.pop %v801
        %v803 = vmul.f32 %v798, %v802
        %804 = vrot.lane.b32.xlu0 %v565, 72
        %v805 = vpop.permute.xlu0 %804
        %v808 = vsel %vm567, %v803, 0
        %810 = vmatpush.msra.mxu0 0.0
        %811 = vmatpush.msra.mxu0 0.0
        %812 = vmatpush.msra.mxu0 0.0
        %813 = vmatpush.msra.mxu0 0.0
        %814 = vmatpush.msra.mxu0 0.0
        %815 = vmatpush.msra.mxu0 0.0
        %816 = vmatpush.msra.mxu0 0.0
        %817 = vmatpush.msra.mxu0 0.0
        %818 = vmatpush.msra.mxu0 0.0
        %819 = vmatpush.msra.mxu0 0.0
        %820 = vmatpush.msra.mxu0 0.0
        %821 = vmatpush.msra.mxu0 0.0
        %822 = vmatpush.msra.mxu0 0.0
        %823 = vmatpush.msra.mxu0 0.0
        %824 = vmatpush.msra.mxu0 0.0
        %825 = vmatpush.msra.mxu0 %v805
        %826 = vmatmul.f32.gmra.mxu0 %v808
        %v827 = vpop.f32.mrf.mxu0
        %v828 = vadd.f32 0.0, %v827
        %829 = vdwg.mxu0
        %831 = vrot.lane.b32.xlu0 %v696, 8
        %v832 = vpop.permute.xlu0 %831
        %835 = vrot.lane.b32.xlu0 %v762, 16
        %v836 = vpop.permute.xlu0 %835
        %839 = vrot.lane.b32.xlu0 %v828, 24
        %v840 = vpop.permute.xlu0 %839
        %v842 = vsel %vm567, %v630, %v832
        %vm843 = vcmask 130048
        %v844 = vsel %vm843, %v842, %v836
        %vm845 = vcmask 195584
        %v846 = vsel %vm845, %v844, %v840
        %v847 = vld [vmem:[#allocation9] sm:$0xff]
        %v848 = vld [vmem:[#allocation9 + $0x8] sm:$0xff]
        %v849 = vld [vmem:[#allocation9 + $0x10] sm:$0xff]
        %v850 = vld [vmem:[#allocation9 + $0x18] sm:$0xff]
        %v851 = vld [vmem:[#allocation10] sm:$0x1]
        %v853 = vperm.slane %v851, 0
        %v856 = vsel %vm512, %v846, 0
        %858 = vmatpush.msra.mxu0 0.0
        %859 = vmatpush.msra.mxu0 0.0
        %860 = vmatpush.msra.mxu0 0.0
        %861 = vmatpush.msra.mxu0 0.0
        %862 = vmatpush.msra.mxu0 0.0
        %863 = vmatpush.msra.mxu0 0.0
        %864 = vmatpush.msra.mxu0 0.0
        %865 = vmatpush.msra.mxu0 0.0
        %866 = vmatpush.msra.mxu0 0.0
        %867 = vmatpush.msra.mxu0 0.0
        %868 = vmatpush.msra.mxu0 0.0
        %869 = vmatpush.msra.mxu0 0.0
        %870 = vmatpush.msra.mxu0 %v850
        %871 = vmatpush.msra.mxu0 %v849
        %872 = vmatpush.msra.mxu0 %v848
        %873 = vmatpush.msra.mxu0 %v847
        %874 = vmatmul.f32.gmra.mxu0 %v856
        %v875 = vpop.f32.mrf.mxu0
        %v876 = vadd.f32 %v853, %v875
        %877 = vdwg.mxu0
        %v878 = vadd.f32 %v876, %v502
        %v879 = vsel %vm512, %v878, 0.0
        %880 = vadd.xlane.f32.xlu0 %v879
        %v881 = vpop.xlane.xlu0 %880
        %v882 = vrcp.pop 32.0
        %v883 = vmul.f32 32.0, %v882
        %v884 = vsub.f32 1.0, %v883
        %v885 = vmul.f32 %v882, %v884
        %v886 = vadd.f32 %v882, %v885
        %vm887 = vweird.f32 %v882
        %v888 = vsel %vm887, %v882, %v886
        %v889 = vmul.f32 %v881, %v888
        %v890 = vsub.f32 %v878, %v889
        %v891 = vmul.f32 %v890, %v890
        %v892 = vsel %vm512, %v891, 0.0
        %893 = vadd.xlane.f32.xlu0 %v892
        %v894 = vpop.xlane.xlu0 %893
        %v895 = vmul.f32 %v894, %v888
        %v896 = vadd.f32 %v895, 1e-05
        %v897 = vrsqrt.pop %v896
        %v898 = vmul.f32 %v897, %v896
        %v899 = vmul.f32 %v898, %v897
        %v900 = vmul.f32 0.5, %v899
        %v901 = vsub.f32 1.5, %v900
        %v902 = vmul.f32 %v897, %v901
        %vm903 = vweird.f32 %v896
        %vm904 = vweird.f32 %v897
        %vm905 = vmor %vm903, %vm904
        %v906 = vsel %vm905, %v897, %v902
        %v907 = vmul.f32 %v890, %v906
        %v908 = vld [vmem:[#allocation12] sm:$0x1]
        %v910 = vperm.slane %v908, 0
        %v912 = vmul.f32 %v907, %v910
        %v913 = vld [vmem:[#allocation13] sm:$0x1]
        %v915 = vperm.slane %v913, 0
        %v917 = vadd.f32 %v912, %v915
        %918 = vst.msk [vmem:[%s501] sm:$0xff] %vm512, %v917
        %p919 = scmp.lt.s32.totalorder %s28, 1
        %s920 = scalar_select %p919, %s28, 1
        %s921 = smul.addr %s920, 8
        %s922 = scalar_lea.vmem %s10, %s921
        // Predicated region
        $region93: #{decoder_forward.4} parent=59 // pred_check
          %p923 = pneg %p266
        $region94: #{decoder_forward.4} parent=59 // pred_check_branch
          %925 = sbr.rel (%p923) target = $region96
        $region95: #{decoder_forward.4} parent=59 // pred_region
          _
        $region96: #{decoder_forward.4} parent=59 // pred_fallthru
          _
      $region60: #{decoder_forward.4} parent=5 // pred_fallthru
        _
      %p926 = scmp.le.s32.totalorder 2, %s23
      // Predicated region
      $region97: #{decoder_forward.4} parent=5 // pred_check
        %p927 = pneg %p926
      $region98: #{decoder_forward.4} parent=5 // pred_check_branch
        %929 = sbr.rel (%p927) target = $region100
      $region99: #{decoder_forward.4} parent=5 // pred_region
        %s930 = ssub.s32 %s23, 2
        // Predicated region
        $region101: #{decoder_forward.4} parent=99 // pred_check
          %p931 = pneg %p272
        $region102: #{decoder_forward.4} parent=99 // pred_check_branch
          %933 = sbr.rel (%p931) target = $region104
        $region103: #{decoder_forward.4} parent=99 // pred_region
          %p934 = scmp.lt.s32.totalorder %s29, 1
          %s935 = scalar_select %p934, %s29, 1
          %s936 = smul.addr %s935, 8
          %s937 = scalar_lea.vmem %s10, %s936
        $region104: #{decoder_forward.4} parent=99 // pred_fallthru
          _
      $region100: #{decoder_forward.4} parent=5 // pred_fallthru
        _
    $region6: #{decoder_forward.4} parent=1 // loop_footer
      %s27 = sadd.s32 1, %s23
    $region7: #{decoder_forward.4} parent=1 // loop_footer_branch
      %22 = sbr.rel target = $region3
    $region8: #{decoder_forward.4} parent=1 // loop_exit
      _
    %938 = vsyncpa [#allocation3], 1
    %s939 = scalar_lea.sflag [#allocation3], 1
    %940 = vsyncpa %s939, 1
    %941 = vsyncpa [#allocation5], 1
    %942 = vsyncpa [#allocation8], 1
    %943 = vsyncpa [#allocation11], 1
    %944 = vsyncpa [#allocation14], 1

</llo_original>
